<compile_context>
chip_gen: v7x
topology: tpu7x:2x2x1
jax: 0.10.0
libtpu: 0.0.40
codegen_flags: <defaults>
</compile_context>

<pallas_src>
import jax
import jax.numpy as jnp
from jax.experimental import pallas as pl
from jax.experimental.pallas import tpu as pltpu

HIDDEN_DIM = 32
INPUT_DIM = 1
NUM_LAYERS = 2
OUTPUT_DIM = 1
GATE_PAD = 128          # 3*H = 96 gate lanes padded to one full vreg width


def default_compute_dtype():
    """bf16 MXU operands on v6e/v7x, f32 elsewhere (v5e has no bf16 VPU/EUP path)."""
    kind = jax.devices()[0].device_kind.lower()
    return jnp.bfloat16 if ("v6" in kind or "v7" in kind) else jnp.float32


def gru_kernel(gi0_ref,      # (T, B, P)  f32   layer-0 input gates incl. b_ih0, lane-padded
               w0pack_ref,   # (H, 2P)    cdt   [Whh0^T | 0 | Wih1^T | 0]  (128-lane aligned)
               bhh0_ref,     # (1, P)     f32
               bih1_ref,     # (1, P)     f32
               whh1_ref,     # (H, P)     cdt   [Whh1^T | 0]
               bhh1_ref,     # (1, P)     f32
               fcw_ref,      # (H, O)     f32
               fcb_ref,      # (1, O)     f32
               out_ref):     # (B, O)     f32
    T, B, P = gi0_ref.shape
    H = w0pack_ref.shape[0]
    cdt = w0pack_ref.dtype

    w0pack = w0pack_ref[...]          # (H, 2P)
    whh1 = whh1_ref[...]              # (H, P)

    # Hoist bias broadcasts out of the recurrence (JAX does not CSE broadcast_in_dim).
    bhh0_b = jnp.broadcast_to(bhh0_ref[...], (B, P))
    bih1_b = jnp.broadcast_to(bih1_ref[...], (B, P))
    bhh1_b = jnp.broadcast_to(bhh1_ref[...], (B, P))

    h0 = jnp.zeros((B, H), jnp.float32)
    h1 = jnp.zeros((B, H), jnp.float32)

    # t = 0 prologue: h_{-1} = 0  =>  gh = b_hh (no matmul needed).
    gh0 = bhh0_b                      # layer-0 hidden gates for step t (carried)
    gh1 = bhh1_b                      # layer-1 hidden gates for step t (carried)

    # Fully unrolled: T is small/static, gives the scheduler cross-step visibility.
    # TODO(synk): if T grows (>= ~64), switch to lax.fori_loop(..., unroll=4) with
    # gi0 kept in VMEM scratch to bound vreg live ranges.
    for t in range(T):
        # ----- layer 0 (pure VPU/EUP; gi0 precomputed, gh0 carried from t-1) -----
        gi0 = gi0_ref[t]                                           # (B, P)
        s0 = jax.nn.sigmoid(gi0 + gh0)      # full width; n/pad lanes discarded (EUP slack)
        r0 = s0[:, :H]
        z0 = s0[:, H:2 * H]
        n0 = jnp.tanh(gi0[:, 2 * H:3 * H] + r0 * gh0[:, 2 * H:3 * H])
        h0 = (1.0 - z0) * n0 + z0 * h0

        # ----- single on-critical-path matmul: [gh0(t+1) | gi1(t)] from the new h0 -----
        fused = jnp.dot(h0.astype(cdt), w0pack,
                        preferred_element_type=jnp.float32)        # (B, 2P)
        gi1 = fused[:, P:] + bih1_b        # vreg-aligned slice (lanes 128..255)
        gh0 = fused[:, :P] + bhh0_b        # carried to next step's layer 0

        # ----- layer 1 (VPU/EUP; gh1 carried from t-1) -----
        s1 = jax.nn.sigmoid(gi1 + gh1)
        r1 = s1[:, :H]
        z1 = s1[:, H:2 * H]
        n1 = jnp.tanh(gi1[:, 2 * H:3 * H] + r1 * gh1[:, 2 * H:3 * H])
        h1 = (1.0 - z1) * n1 + z1 * h1

        # ----- off-critical-path matmul: gh1 for the NEXT step; drop the trailing one -----
        if t < T - 1:
            gh1 = jnp.dot(h1.astype(cdt), whh1,
                          preferred_element_type=jnp.float32) + bhh1_b

    # fc on the last time step's top-layer hidden state (kept f32; single tiny matmul).
    out_ref[...] = (jnp.dot(h1, fcw_ref[...],
                            preferred_element_type=jnp.float32) + fcb_ref[...])


def pack_params(params, compute_dtype=None):
    """One-time weight packing. Call ONCE and reuse; do not re-pack per forward call."""
    if compute_dtype is None:
        compute_dtype = default_compute_dtype()
    H, P, O = HIDDEN_DIM, GATE_PAD, OUTPUT_DIM
    H3 = 3 * H
    f32 = jnp.float32

    # Layer-0 input projection rows (D_in == 1), lane-padded to P.
    wih0_row = jnp.zeros((1, 1, P), f32).at[0, 0, :H3].set(params["w_ih0"][:, 0].astype(f32))
    bih0_row = jnp.zeros((1, 1, P), f32).at[0, 0, :H3].set(params["b_ih0"].astype(f32))

    # Critical-path fused weights: h0 @ [Whh0^T | Wih1^T], each block 128-lane aligned.
    w0pack = jnp.zeros((H, 2 * P), f32)
    w0pack = w0pack.at[:, :H3].set(params["w_hh0"].T.astype(f32))
    w0pack = w0pack.at[:, P:P + H3].set(params["w_ih1"].T.astype(f32))

    # Off-critical-path layer-1 hidden weights, lane-padded.
    whh1p = jnp.zeros((H, P), f32).at[:, :H3].set(params["w_hh1"].T.astype(f32))

    bhh0p = jnp.zeros((1, P), f32).at[0, :H3].set(params["b_hh0"].astype(f32))
    bih1p = jnp.zeros((1, P), f32).at[0, :H3].set(params["b_ih1"].astype(f32))
    bhh1p = jnp.zeros((1, P), f32).at[0, :H3].set(params["b_hh1"].astype(f32))

    fcw = params["fc_w"].T.astype(f32)                   # (H, O)
    fcb = params["fc_b"].reshape(1, O).astype(f32)

    return {
        "wih0_row": wih0_row,
        "bih0_row": bih0_row,
        "w0pack": w0pack.astype(compute_dtype),
        "whh1p": whh1p.astype(compute_dtype),
        "bhh0p": bhh0p,
        "bih1p": bih1p,
        "bhh1p": bhh1p,
        "fcw": fcw,
        "fcb": fcb,
    }


@jax.jit
def gru_forward(x, packed):
    """x: (B, T, D_in) float32, packed: pack_params(...) output. Returns (B, OUTPUT_DIM)."""
    B = x.shape[0]
    xt = jnp.transpose(x, (1, 0, 2)).astype(jnp.float32)          # (T, B, 1)
    # Hoisted layer-0 input projection (incl. b_ih0), padded to 128 lanes (~6 KB).
    gi0_all = xt * packed["wih0_row"] + packed["bih0_row"]        # (T, B, P)

    inputs = (gi0_all, packed["w0pack"], packed["bhh0p"], packed["bih1p"],
              packed["whh1p"], packed["bhh1p"], packed["fcw"], packed["fcb"])
    vmem = pltpu.MemorySpace.VMEM
    # Whole problem is <0.1 MiB of VMEM -> no grid/tiling/pipelining needed.
    # TODO(synk): for production batches (>= a few hundred rows per TensorCore), add a
    # grid over B with dimension_semantics=("parallel",); size per-block VMEM for the
    # 64 MiB v7x budget (not 128 MiB) with double-buffering headroom.
    return pl.pallas_call(
        gru_kernel,
        out_shape=jax.ShapeDtypeStruct((B, OUTPUT_DIM), jnp.float32),
        in_specs=[pl.BlockSpec(memory_space=vmem) for _ in inputs],
        out_specs=pl.BlockSpec(memory_space=vmem),
    )(*inputs)


def gru_forward_ref(x, params):
    """Pure-JAX f32 reference mirroring PyTorch nn.GRU (gate order [r|z|n]) + Linear."""
    H = HIDDEN_DIM
    B, T, _ = x.shape

    def cell(x_t, h_prev, wih, whh, bih, bhh):
        gi = x_t @ wih.T + bih
        gh = h_prev @ whh.T + bhh
        r = jax.nn.sigmoid(gi[:, :H] + gh[:, :H])
        z = jax.nn.sigmoid(gi[:, H:2 * H] + gh[:, H:2 * H])
        n = jnp.tanh(gi[:, 2 * H:] + r * gh[:, 2 * H:])
        return (1.0 - z) * n + z * h_prev

    h0 = jnp.zeros((B, H), jnp.float32)
    h1 = jnp.zeros((B, H), jnp.float32)
    for t in range(T):
        h0 = cell(x[:, t, :], h0, params["w_ih0"], params["w_hh0"],
                  params["b_ih0"], params["b_hh0"])
        h1 = cell(h0, h1, params["w_ih1"], params["w_hh1"],
                  params["b_ih1"], params["b_hh1"])
    return h1 @ params["fc_w"].T + params["fc_b"]


def init_params(key):
    """Deterministic init mimicking PyTorch's U(-1/sqrt(H), 1/sqrt(H)) shapes."""
    H, D, O = HIDDEN_DIM, INPUT_DIM, OUTPUT_DIM
    k = 1.0 / jnp.sqrt(jnp.float32(H))
    keys = jax.random.split(key, 10)
    u = lambda kk, shape: jax.random.uniform(kk, shape, jnp.float32, -k, k)
    return {
        # layer 0
        "w_ih0": u(keys[0], (3 * H, D)),
        "w_hh0": u(keys[1], (3 * H, H)),
        "b_ih0": u(keys[2], (3 * H,)),
        "b_hh0": u(keys[3], (3 * H,)),
        # layer 1 (input size = H)
        "w_ih1": u(keys[4], (3 * H, H)),
        "w_hh1": u(keys[5], (3 * H, H)),
        "b_ih1": u(keys[6], (3 * H,)),
        "b_hh1": u(keys[7], (3 * H,)),
        # fc
        "fc_w": u(keys[8], (O, H)),
        "fc_b": u(keys[9], (O,)),
    }


if __name__ == "__main__":
    key = jax.random.PRNGKey(0)
    k_x, k_p = jax.random.split(key)

    B, T = 2, 8
    x = jax.random.normal(k_x, (B, T, INPUT_DIM), jnp.float32)
    params = init_params(k_p)

    compute_dtype = default_compute_dtype()
    packed = pack_params(params, compute_dtype)        # one-time packing, outside the hot path

    out = gru_forward(x, packed)
    out = jax.block_until_ready(out)

    ref = gru_forward_ref(x, params)
    assert out.shape == (B, OUTPUT_DIM), out.shape
    if compute_dtype == jnp.float32:
        tol = dict(atol=1e-5, rtol=1e-5)
    else:
        # bf16 MXU operands (v6e/v7x): looser tolerance per review guidance.
        tol = dict(atol=5e-2, rtol=5e-2)
    assert jnp.allclose(out, ref, **tol), (out, ref)

    print("KERNEL_OK")
</pallas_src>

<mosaic_0001>
module attributes {stable_mosaic.version = 11 : i64} {
  func.func @gru_kernel(%arg0: memref<8x2x128xf32, #tpu.memory_space<vmem>>, %arg1: memref<32x256xf32, #tpu.memory_space<vmem>>, %arg2: memref<1x128xf32, #tpu.memory_space<vmem>>, %arg3: memref<1x128xf32, #tpu.memory_space<vmem>>, %arg4: memref<32x128xf32, #tpu.memory_space<vmem>>, %arg5: memref<1x128xf32, #tpu.memory_space<vmem>>, %arg6: memref<32x1xf32, #tpu.memory_space<vmem>>, %arg7: memref<1x1xf32, #tpu.memory_space<vmem>>, %arg8: memref<2x1xf32, #tpu.memory_space<vmem>>) attributes {dimension_semantics = [], scalar_prefetch = 0 : i64, scratch_operands = 0 : i64, tpu.core_type = #tpu.core_type<tc>} {
    %c0 = arith.constant 0 : index
    %c0_0 = arith.constant 0 : index
    %0 = vector.load %arg1[%c0, %c0_0] : memref<32x256xf32, #tpu.memory_space<vmem>>, vector<32x256xf32>
    %c0_1 = arith.constant 0 : index
    %c0_2 = arith.constant 0 : index
    %1 = vector.load %arg4[%c0_1, %c0_2] : memref<32x128xf32, #tpu.memory_space<vmem>>, vector<32x128xf32>
    %c0_3 = arith.constant 0 : index
    %c0_4 = arith.constant 0 : index
    %2 = vector.load %arg2[%c0_3, %c0_4] : memref<1x128xf32, #tpu.memory_space<vmem>>, vector<1x128xf32>
    %3 = vector.shape_cast %2 : vector<1x128xf32> to vector<1x128xf32>
    %4 = vector.broadcast %3 : vector<1x128xf32> to vector<2x128xf32>
    %c0_5 = arith.constant 0 : index
    %c0_6 = arith.constant 0 : index
    %5 = vector.load %arg3[%c0_5, %c0_6] : memref<1x128xf32, #tpu.memory_space<vmem>>, vector<1x128xf32>
    %6 = vector.shape_cast %5 : vector<1x128xf32> to vector<1x128xf32>
    %7 = vector.broadcast %6 : vector<1x128xf32> to vector<2x128xf32>
    %c0_7 = arith.constant 0 : index
    %c0_8 = arith.constant 0 : index
    %8 = vector.load %arg5[%c0_7, %c0_8] : memref<1x128xf32, #tpu.memory_space<vmem>>, vector<1x128xf32>
    %9 = vector.shape_cast %8 : vector<1x128xf32> to vector<1x128xf32>
    %10 = vector.broadcast %9 : vector<1x128xf32> to vector<2x128xf32>
    %cst = arith.constant 0.000000e+00 : f32
    %11 = vector.broadcast %cst : f32 to vector<2x32xf32>
    %cst_9 = arith.constant 0.000000e+00 : f32
    %12 = vector.broadcast %cst_9 : f32 to vector<2x32xf32>
    %c0_10 = arith.constant 0 : index
    %c0_11 = arith.constant 0 : index
    %c0_12 = arith.constant 0 : index
    %13 = vector.load %arg0[%c0_10, %c0_11, %c0_12] : memref<8x2x128xf32, #tpu.memory_space<vmem>>, vector<1x2x128xf32>
    %14 = vector.shape_cast %13 : vector<1x2x128xf32> to vector<2x128xf32>
    %15 = arith.addf %14, %4 : vector<2x128xf32>
    %16 = arith.negf %15 : vector<2x128xf32>
    %17 = math.exp %16 : vector<2x128xf32>
    %cst_13 = arith.constant 1.000000e+00 : f32
    %18 = vector.broadcast %cst_13 : f32 to vector<2x128xf32>
    %19 = arith.addf %18, %17 : vector<2x128xf32>
    %20 = arith.divf %18, %19 : vector<2x128xf32>
    %21 = vector.extract_strided_slice %20 {offsets = [0, 0], sizes = [2, 32], strides = [1, 1]} : vector<2x128xf32> to vector<2x32xf32>
    %22 = vector.extract_strided_slice %20 {offsets = [0, 32], sizes = [2, 32], strides = [1, 1]} : vector<2x128xf32> to vector<2x32xf32>
    %23 = vector.extract_strided_slice %14 {offsets = [0, 64], sizes = [2, 32], strides = [1, 1]} : vector<2x128xf32> to vector<2x32xf32>
    %24 = vector.extract_strided_slice %4 {offsets = [0, 64], sizes = [2, 32], strides = [1, 1]} : vector<2x128xf32> to vector<2x32xf32>
    %25 = arith.mulf %21, %24 : vector<2x32xf32>
    %26 = arith.addf %23, %25 : vector<2x32xf32>
    %27 = math.tanh %26 : vector<2x32xf32>
    %cst_14 = arith.constant 1.000000e+00 : f32
    %28 = vector.broadcast %cst_14 : f32 to vector<2x32xf32>
    %29 = arith.subf %28, %22 : vector<2x32xf32>
    %30 = arith.mulf %29, %27 : vector<2x32xf32>
    %31 = arith.mulf %22, %11 : vector<2x32xf32>
    %32 = arith.addf %30, %31 : vector<2x32xf32>
    %cst_15 = arith.constant dense<0.000000e+00> : vector<2x256xf32>
    %33 = tpu.matmul %32, %0, %cst_15 {dimension_numbers = #tpu.dot_dimension_numbers<[1], [0], [0], [1], [0, 0, 1, 1], [], []>} : vector<2x32xf32>, vector<32x256xf32>, vector<2x256xf32> -> vector<2x256xf32>
    %34 = vector.extract_strided_slice %33 {offsets = [0, 128], sizes = [2, 128], strides = [1, 1]} : vector<2x256xf32> to vector<2x128xf32>
    %35 = arith.addf %34, %7 : vector<2x128xf32>
    %36 = vector.extract_strided_slice %33 {offsets = [0, 0], sizes = [2, 128], strides = [1, 1]} : vector<2x256xf32> to vector<2x128xf32>
    %37 = arith.addf %36, %4 : vector<2x128xf32>
    %38 = arith.addf %35, %10 : vector<2x128xf32>
    %39 = arith.negf %38 : vector<2x128xf32>
    %40 = math.exp %39 : vector<2x128xf32>
    %cst_16 = arith.constant 1.000000e+00 : f32
    %41 = vector.broadcast %cst_16 : f32 to vector<2x128xf32>
    %42 = arith.addf %41, %40 : vector<2x128xf32>
    %43 = arith.divf %41, %42 : vector<2x128xf32>
    %44 = vector.extract_strided_slice %43 {offsets = [0, 0], sizes = [2, 32], strides = [1, 1]} : vector<2x128xf32> to vector<2x32xf32>
    %45 = vector.extract_strided_slice %43 {offsets = [0, 32], sizes = [2, 32], strides = [1, 1]} : vector<2x128xf32> to vector<2x32xf32>
    %46 = vector.extract_strided_slice %35 {offsets = [0, 64], sizes = [2, 32], strides = [1, 1]} : vector<2x128xf32> to vector<2x32xf32>
    %47 = vector.extract_strided_slice %10 {offsets = [0, 64], sizes = [2, 32], strides = [1, 1]} : vector<2x128xf32> to vector<2x32xf32>
    %48 = arith.mulf %44, %47 : vector<2x32xf32>
    %49 = arith.addf %46, %48 : vector<2x32xf32>
    %50 = math.tanh %49 : vector<2x32xf32>
    %cst_17 = arith.constant 1.000000e+00 : f32
    %51 = vector.broadcast %cst_17 : f32 to vector<2x32xf32>
    %52 = arith.subf %51, %45 : vector<2x32xf32>
    %53 = arith.mulf %52, %50 : vector<2x32xf32>
    %54 = arith.mulf %45, %12 : vector<2x32xf32>
    %55 = arith.addf %53, %54 : vector<2x32xf32>
    %cst_18 = arith.constant dense<0.000000e+00> : vector<2x128xf32>
    %56 = tpu.matmul %55, %1, %cst_18 {dimension_numbers = #tpu.dot_dimension_numbers<[1], [0], [0], [1], [0, 0, 1, 1], [], []>} : vector<2x32xf32>, vector<32x128xf32>, vector<2x128xf32> -> vector<2x128xf32>
    %57 = arith.addf %56, %10 : vector<2x128xf32>
    %c1 = arith.constant 1 : index
    %c0_19 = arith.constant 0 : index
    %c0_20 = arith.constant 0 : index
    %58 = vector.load %arg0[%c1, %c0_19, %c0_20] : memref<8x2x128xf32, #tpu.memory_space<vmem>>, vector<1x2x128xf32>
    %59 = vector.shape_cast %58 : vector<1x2x128xf32> to vector<2x128xf32>
    %60 = arith.addf %59, %37 : vector<2x128xf32>
    %61 = arith.negf %60 : vector<2x128xf32>
    %62 = math.exp %61 : vector<2x128xf32>
    %cst_21 = arith.constant 1.000000e+00 : f32
    %63 = vector.broadcast %cst_21 : f32 to vector<2x128xf32>
    %64 = arith.addf %63, %62 : vector<2x128xf32>
    %65 = arith.divf %63, %64 : vector<2x128xf32>
    %66 = vector.extract_strided_slice %65 {offsets = [0, 0], sizes = [2, 32], strides = [1, 1]} : vector<2x128xf32> to vector<2x32xf32>
    %67 = vector.extract_strided_slice %65 {offsets = [0, 32], sizes = [2, 32], strides = [1, 1]} : vector<2x128xf32> to vector<2x32xf32>
    %68 = vector.extract_strided_slice %59 {offsets = [0, 64], sizes = [2, 32], strides = [1, 1]} : vector<2x128xf32> to vector<2x32xf32>
    %69 = vector.extract_strided_slice %37 {offsets = [0, 64], sizes = [2, 32], strides = [1, 1]} : vector<2x128xf32> to vector<2x32xf32>
    %70 = arith.mulf %66, %69 : vector<2x32xf32>
    %71 = arith.addf %68, %70 : vector<2x32xf32>
    %72 = math.tanh %71 : vector<2x32xf32>
    %cst_22 = arith.constant 1.000000e+00 : f32
    %73 = vector.broadcast %cst_22 : f32 to vector<2x32xf32>
    %74 = arith.subf %73, %67 : vector<2x32xf32>
    %75 = arith.mulf %74, %72 : vector<2x32xf32>
    %76 = arith.mulf %67, %32 : vector<2x32xf32>
    %77 = arith.addf %75, %76 : vector<2x32xf32>
    %cst_23 = arith.constant dense<0.000000e+00> : vector<2x256xf32>
    %78 = tpu.matmul %77, %0, %cst_23 {dimension_numbers = #tpu.dot_dimension_numbers<[1], [0], [0], [1], [0, 0, 1, 1], [], []>} : vector<2x32xf32>, vector<32x256xf32>, vector<2x256xf32> -> vector<2x256xf32>
    %79 = vector.extract_strided_slice %78 {offsets = [0, 128], sizes = [2, 128], strides = [1, 1]} : vector<2x256xf32> to vector<2x128xf32>
    %80 = arith.addf %79, %7 : vector<2x128xf32>
    %81 = vector.extract_strided_slice %78 {offsets = [0, 0], sizes = [2, 128], strides = [1, 1]} : vector<2x256xf32> to vector<2x128xf32>
    %82 = arith.addf %81, %4 : vector<2x128xf32>
    %83 = arith.addf %80, %57 : vector<2x128xf32>
    %84 = arith.negf %83 : vector<2x128xf32>
    %85 = math.exp %84 : vector<2x128xf32>
    %cst_24 = arith.constant 1.000000e+00 : f32
    %86 = vector.broadcast %cst_24 : f32 to vector<2x128xf32>
    %87 = arith.addf %86, %85 : vector<2x128xf32>
    %88 = arith.divf %86, %87 : vector<2x128xf32>
    %89 = vector.extract_strided_slice %88 {offsets = [0, 0], sizes = [2, 32], strides = [1, 1]} : vector<2x128xf32> to vector<2x32xf32>
    %90 = vector.extract_strided_slice %88 {offsets = [0, 32], sizes = [2, 32], strides = [1, 1]} : vector<2x128xf32> to vector<2x32xf32>
    %91 = vector.extract_strided_slice %80 {offsets = [0, 64], sizes = [2, 32], strides = [1, 1]} : vector<2x128xf32> to vector<2x32xf32>
    %92 = vector.extract_strided_slice %57 {offsets = [0, 64], sizes = [2, 32], strides = [1, 1]} : vector<2x128xf32> to vector<2x32xf32>
    %93 = arith.mulf %89, %92 : vector<2x32xf32>
    %94 = arith.addf %91, %93 : vector<2x32xf32>
    %95 = math.tanh %94 : vector<2x32xf32>
    %cst_25 = arith.constant 1.000000e+00 : f32
    %96 = vector.broadcast %cst_25 : f32 to vector<2x32xf32>
    %97 = arith.subf %96, %90 : vector<2x32xf32>
    %98 = arith.mulf %97, %95 : vector<2x32xf32>
    %99 = arith.mulf %90, %55 : vector<2x32xf32>
    %100 = arith.addf %98, %99 : vector<2x32xf32>
    %cst_26 = arith.constant dense<0.000000e+00> : vector<2x128xf32>
    %101 = tpu.matmul %100, %1, %cst_26 {dimension_numbers = #tpu.dot_dimension_numbers<[1], [0], [0], [1], [0, 0, 1, 1], [], []>} : vector<2x32xf32>, vector<32x128xf32>, vector<2x128xf32> -> vector<2x128xf32>
    %102 = arith.addf %101, %10 : vector<2x128xf32>
    %c2 = arith.constant 2 : index
    %c0_27 = arith.constant 0 : index
    %c0_28 = arith.constant 0 : index
    %103 = vector.load %arg0[%c2, %c0_27, %c0_28] : memref<8x2x128xf32, #tpu.memory_space<vmem>>, vector<1x2x128xf32>
    %104 = vector.shape_cast %103 : vector<1x2x128xf32> to vector<2x128xf32>
    %105 = arith.addf %104, %82 : vector<2x128xf32>
    %106 = arith.negf %105 : vector<2x128xf32>
    %107 = math.exp %106 : vector<2x128xf32>
    %cst_29 = arith.constant 1.000000e+00 : f32
    %108 = vector.broadcast %cst_29 : f32 to vector<2x128xf32>
    %109 = arith.addf %108, %107 : vector<2x128xf32>
    %110 = arith.divf %108, %109 : vector<2x128xf32>
    %111 = vector.extract_strided_slice %110 {offsets = [0, 0], sizes = [2, 32], strides = [1, 1]} : vector<2x128xf32> to vector<2x32xf32>
    %112 = vector.extract_strided_slice %110 {offsets = [0, 32], sizes = [2, 32], strides = [1, 1]} : vector<2x128xf32> to vector<2x32xf32>
    %113 = vector.extract_strided_slice %104 {offsets = [0, 64], sizes = [2, 32], strides = [1, 1]} : vector<2x128xf32> to vector<2x32xf32>
    %114 = vector.extract_strided_slice %82 {offsets = [0, 64], sizes = [2, 32], strides = [1, 1]} : vector<2x128xf32> to vector<2x32xf32>
    %115 = arith.mulf %111, %114 : vector<2x32xf32>
    %116 = arith.addf %113, %115 : vector<2x32xf32>
    %117 = math.tanh %116 : vector<2x32xf32>
    %cst_30 = arith.constant 1.000000e+00 : f32
    %118 = vector.broadcast %cst_30 : f32 to vector<2x32xf32>
    %119 = arith.subf %118, %112 : vector<2x32xf32>
    %120 = arith.mulf %119, %117 : vector<2x32xf32>
    %121 = arith.mulf %112, %77 : vector<2x32xf32>
    %122 = arith.addf %120, %121 : vector<2x32xf32>
    %cst_31 = arith.constant dense<0.000000e+00> : vector<2x256xf32>
    %123 = tpu.matmul %122, %0, %cst_31 {dimension_numbers = #tpu.dot_dimension_numbers<[1], [0], [0], [1], [0, 0, 1, 1], [], []>} : vector<2x32xf32>, vector<32x256xf32>, vector<2x256xf32> -> vector<2x256xf32>
    %124 = vector.extract_strided_slice %123 {offsets = [0, 128], sizes = [2, 128], strides = [1, 1]} : vector<2x256xf32> to vector<2x128xf32>
    %125 = arith.addf %124, %7 : vector<2x128xf32>
    %126 = vector.extract_strided_slice %123 {offsets = [0, 0], sizes = [2, 128], strides = [1, 1]} : vector<2x256xf32> to vector<2x128xf32>
    %127 = arith.addf %126, %4 : vector<2x128xf32>
    %128 = arith.addf %125, %102 : vector<2x128xf32>
    %129 = arith.negf %128 : vector<2x128xf32>
    %130 = math.exp %129 : vector<2x128xf32>
    %cst_32 = arith.constant 1.000000e+00 : f32
    %131 = vector.broadcast %cst_32 : f32 to vector<2x128xf32>
    %132 = arith.addf %131, %130 : vector<2x128xf32>
    %133 = arith.divf %131, %132 : vector<2x128xf32>
    %134 = vector.extract_strided_slice %133 {offsets = [0, 0], sizes = [2, 32], strides = [1, 1]} : vector<2x128xf32> to vector<2x32xf32>
    %135 = vector.extract_strided_slice %133 {offsets = [0, 32], sizes = [2, 32], strides = [1, 1]} : vector<2x128xf32> to vector<2x32xf32>
    %136 = vector.extract_strided_slice %125 {offsets = [0, 64], sizes = [2, 32], strides = [1, 1]} : vector<2x128xf32> to vector<2x32xf32>
    %137 = vector.extract_strided_slice %102 {offsets = [0, 64], sizes = [2, 32], strides = [1, 1]} : vector<2x128xf32> to vector<2x32xf32>
    %138 = arith.mulf %134, %137 : vector<2x32xf32>
    %139 = arith.addf %136, %138 : vector<2x32xf32>
    %140 = math.tanh %139 : vector<2x32xf32>
    %cst_33 = arith.constant 1.000000e+00 : f32
    %141 = vector.broadcast %cst_33 : f32 to vector<2x32xf32>
    %142 = arith.subf %141, %135 : vector<2x32xf32>
    %143 = arith.mulf %142, %140 : vector<2x32xf32>
    %144 = arith.mulf %135, %100 : vector<2x32xf32>
    %145 = arith.addf %143, %144 : vector<2x32xf32>
    %cst_34 = arith.constant dense<0.000000e+00> : vector<2x128xf32>
    %146 = tpu.matmul %145, %1, %cst_34 {dimension_numbers = #tpu.dot_dimension_numbers<[1], [0], [0], [1], [0, 0, 1, 1], [], []>} : vector<2x32xf32>, vector<32x128xf32>, vector<2x128xf32> -> vector<2x128xf32>
    %147 = arith.addf %146, %10 : vector<2x128xf32>
    %c3 = arith.constant 3 : index
    %c0_35 = arith.constant 0 : index
    %c0_36 = arith.constant 0 : index
    %148 = vector.load %arg0[%c3, %c0_35, %c0_36] : memref<8x2x128xf32, #tpu.memory_space<vmem>>, vector<1x2x128xf32>
    %149 = vector.shape_cast %148 : vector<1x2x128xf32> to vector<2x128xf32>
    %150 = arith.addf %149, %127 : vector<2x128xf32>
    %151 = arith.negf %150 : vector<2x128xf32>
    %152 = math.exp %151 : vector<2x128xf32>
    %cst_37 = arith.constant 1.000000e+00 : f32
    %153 = vector.broadcast %cst_37 : f32 to vector<2x128xf32>
    %154 = arith.addf %153, %152 : vector<2x128xf32>
    %155 = arith.divf %153, %154 : vector<2x128xf32>
    %156 = vector.extract_strided_slice %155 {offsets = [0, 0], sizes = [2, 32], strides = [1, 1]} : vector<2x128xf32> to vector<2x32xf32>
    %157 = vector.extract_strided_slice %155 {offsets = [0, 32], sizes = [2, 32], strides = [1, 1]} : vector<2x128xf32> to vector<2x32xf32>
    %158 = vector.extract_strided_slice %149 {offsets = [0, 64], sizes = [2, 32], strides = [1, 1]} : vector<2x128xf32> to vector<2x32xf32>
    %159 = vector.extract_strided_slice %127 {offsets = [0, 64], sizes = [2, 32], strides = [1, 1]} : vector<2x128xf32> to vector<2x32xf32>
    %160 = arith.mulf %156, %159 : vector<2x32xf32>
    %161 = arith.addf %158, %160 : vector<2x32xf32>
    %162 = math.tanh %161 : vector<2x32xf32>
    %cst_38 = arith.constant 1.000000e+00 : f32
    %163 = vector.broadcast %cst_38 : f32 to vector<2x32xf32>
    %164 = arith.subf %163, %157 : vector<2x32xf32>
    %165 = arith.mulf %164, %162 : vector<2x32xf32>
    %166 = arith.mulf %157, %122 : vector<2x32xf32>
    %167 = arith.addf %165, %166 : vector<2x32xf32>
    %cst_39 = arith.constant dense<0.000000e+00> : vector<2x256xf32>
    %168 = tpu.matmul %167, %0, %cst_39 {dimension_numbers = #tpu.dot_dimension_numbers<[1], [0], [0], [1], [0, 0, 1, 1], [], []>} : vector<2x32xf32>, vector<32x256xf32>, vector<2x256xf32> -> vector<2x256xf32>
    %169 = vector.extract_strided_slice %168 {offsets = [0, 128], sizes = [2, 128], strides = [1, 1]} : vector<2x256xf32> to vector<2x128xf32>
    %170 = arith.addf %169, %7 : vector<2x128xf32>
    %171 = vector.extract_strided_slice %168 {offsets = [0, 0], sizes = [2, 128], strides = [1, 1]} : vector<2x256xf32> to vector<2x128xf32>
    %172 = arith.addf %171, %4 : vector<2x128xf32>
    %173 = arith.addf %170, %147 : vector<2x128xf32>
    %174 = arith.negf %173 : vector<2x128xf32>
    %175 = math.exp %174 : vector<2x128xf32>
    %cst_40 = arith.constant 1.000000e+00 : f32
    %176 = vector.broadcast %cst_40 : f32 to vector<2x128xf32>
    %177 = arith.addf %176, %175 : vector<2x128xf32>
    %178 = arith.divf %176, %177 : vector<2x128xf32>
    %179 = vector.extract_strided_slice %178 {offsets = [0, 0], sizes = [2, 32], strides = [1, 1]} : vector<2x128xf32> to vector<2x32xf32>
    %180 = vector.extract_strided_slice %178 {offsets = [0, 32], sizes = [2, 32], strides = [1, 1]} : vector<2x128xf32> to vector<2x32xf32>
    %181 = vector.extract_strided_slice %170 {offsets = [0, 64], sizes = [2, 32], strides = [1, 1]} : vector<2x128xf32> to vector<2x32xf32>
    %182 = vector.extract_strided_slice %147 {offsets = [0, 64], sizes = [2, 32], strides = [1, 1]} : vector<2x128xf32> to vector<2x32xf32>
    %183 = arith.mulf %179, %182 : vector<2x32xf32>
    %184 = arith.addf %181, %183 : vector<2x32xf32>
    %185 = math.tanh %184 : vector<2x32xf32>
    %cst_41 = arith.constant 1.000000e+00 : f32
    %186 = vector.broadcast %cst_41 : f32 to vector<2x32xf32>
    %187 = arith.subf %186, %180 : vector<2x32xf32>
    %188 = arith.mulf %187, %185 : vector<2x32xf32>
    %189 = arith.mulf %180, %145 : vector<2x32xf32>
    %190 = arith.addf %188, %189 : vector<2x32xf32>
    %cst_42 = arith.constant dense<0.000000e+00> : vector<2x128xf32>
    %191 = tpu.matmul %190, %1, %cst_42 {dimension_numbers = #tpu.dot_dimension_numbers<[1], [0], [0], [1], [0, 0, 1, 1], [], []>} : vector<2x32xf32>, vector<32x128xf32>, vector<2x128xf32> -> vector<2x128xf32>
    %192 = arith.addf %191, %10 : vector<2x128xf32>
    %c4 = arith.constant 4 : index
    %c0_43 = arith.constant 0 : index
    %c0_44 = arith.constant 0 : index
    %193 = vector.load %arg0[%c4, %c0_43, %c0_44] : memref<8x2x128xf32, #tpu.memory_space<vmem>>, vector<1x2x128xf32>
    %194 = vector.shape_cast %193 : vector<1x2x128xf32> to vector<2x128xf32>
    %195 = arith.addf %194, %172 : vector<2x128xf32>
    %196 = arith.negf %195 : vector<2x128xf32>
    %197 = math.exp %196 : vector<2x128xf32>
    %cst_45 = arith.constant 1.000000e+00 : f32
    %198 = vector.broadcast %cst_45 : f32 to vector<2x128xf32>
    %199 = arith.addf %198, %197 : vector<2x128xf32>
    %200 = arith.divf %198, %199 : vector<2x128xf32>
    %201 = vector.extract_strided_slice %200 {offsets = [0, 0], sizes = [2, 32], strides = [1, 1]} : vector<2x128xf32> to vector<2x32xf32>
    %202 = vector.extract_strided_slice %200 {offsets = [0, 32], sizes = [2, 32], strides = [1, 1]} : vector<2x128xf32> to vector<2x32xf32>
    %203 = vector.extract_strided_slice %194 {offsets = [0, 64], sizes = [2, 32], strides = [1, 1]} : vector<2x128xf32> to vector<2x32xf32>
    %204 = vector.extract_strided_slice %172 {offsets = [0, 64], sizes = [2, 32], strides = [1, 1]} : vector<2x128xf32> to vector<2x32xf32>
    %205 = arith.mulf %201, %204 : vector<2x32xf32>
    %206 = arith.addf %203, %205 : vector<2x32xf32>
    %207 = math.tanh %206 : vector<2x32xf32>
    %cst_46 = arith.constant 1.000000e+00 : f32
    %208 = vector.broadcast %cst_46 : f32 to vector<2x32xf32>
    %209 = arith.subf %208, %202 : vector<2x32xf32>
    %210 = arith.mulf %209, %207 : vector<2x32xf32>
    %211 = arith.mulf %202, %167 : vector<2x32xf32>
    %212 = arith.addf %210, %211 : vector<2x32xf32>
    %cst_47 = arith.constant dense<0.000000e+00> : vector<2x256xf32>
    %213 = tpu.matmul %212, %0, %cst_47 {dimension_numbers = #tpu.dot_dimension_numbers<[1], [0], [0], [1], [0, 0, 1, 1], [], []>} : vector<2x32xf32>, vector<32x256xf32>, vector<2x256xf32> -> vector<2x256xf32>
    %214 = vector.extract_strided_slice %213 {offsets = [0, 128], sizes = [2, 128], strides = [1, 1]} : vector<2x256xf32> to vector<2x128xf32>
    %215 = arith.addf %214, %7 : vector<2x128xf32>
    %216 = vector.extract_strided_slice %213 {offsets = [0, 0], sizes = [2, 128], strides = [1, 1]} : vector<2x256xf32> to vector<2x128xf32>
    %217 = arith.addf %216, %4 : vector<2x128xf32>
    %218 = arith.addf %215, %192 : vector<2x128xf32>
    %219 = arith.negf %218 : vector<2x128xf32>
    %220 = math.exp %219 : vector<2x128xf32>
    %cst_48 = arith.constant 1.000000e+00 : f32
    %221 = vector.broadcast %cst_48 : f32 to vector<2x128xf32>
    %222 = arith.addf %221, %220 : vector<2x128xf32>
    %223 = arith.divf %221, %222 : vector<2x128xf32>
    %224 = vector.extract_strided_slice %223 {offsets = [0, 0], sizes = [2, 32], strides = [1, 1]} : vector<2x128xf32> to vector<2x32xf32>
    %225 = vector.extract_strided_slice %223 {offsets = [0, 32], sizes = [2, 32], strides = [1, 1]} : vector<2x128xf32> to vector<2x32xf32>
    %226 = vector.extract_strided_slice %215 {offsets = [0, 64], sizes = [2, 32], strides = [1, 1]} : vector<2x128xf32> to vector<2x32xf32>
    %227 = vector.extract_strided_slice %192 {offsets = [0, 64], sizes = [2, 32], strides = [1, 1]} : vector<2x128xf32> to vector<2x32xf32>
    %228 = arith.mulf %224, %227 : vector<2x32xf32>
    %229 = arith.addf %226, %228 : vector<2x32xf32>
    %230 = math.tanh %229 : vector<2x32xf32>
    %cst_49 = arith.constant 1.000000e+00 : f32
    %231 = vector.broadcast %cst_49 : f32 to vector<2x32xf32>
    %232 = arith.subf %231, %225 : vector<2x32xf32>
    %233 = arith.mulf %232, %230 : vector<2x32xf32>
    %234 = arith.mulf %225, %190 : vector<2x32xf32>
    %235 = arith.addf %233, %234 : vector<2x32xf32>
    %cst_50 = arith.constant dense<0.000000e+00> : vector<2x128xf32>
    %236 = tpu.matmul %235, %1, %cst_50 {dimension_numbers = #tpu.dot_dimension_numbers<[1], [0], [0], [1], [0, 0, 1, 1], [], []>} : vector<2x32xf32>, vector<32x128xf32>, vector<2x128xf32> -> vector<2x128xf32>
    %237 = arith.addf %236, %10 : vector<2x128xf32>
    %c5 = arith.constant 5 : index
    %c0_51 = arith.constant 0 : index
    %c0_52 = arith.constant 0 : index
    %238 = vector.load %arg0[%c5, %c0_51, %c0_52] : memref<8x2x128xf32, #tpu.memory_space<vmem>>, vector<1x2x128xf32>
    %239 = vector.shape_cast %238 : vector<1x2x128xf32> to vector<2x128xf32>
    %240 = arith.addf %239, %217 : vector<2x128xf32>
    %241 = arith.negf %240 : vector<2x128xf32>
    %242 = math.exp %241 : vector<2x128xf32>
    %cst_53 = arith.constant 1.000000e+00 : f32
    %243 = vector.broadcast %cst_53 : f32 to vector<2x128xf32>
    %244 = arith.addf %243, %242 : vector<2x128xf32>
    %245 = arith.divf %243, %244 : vector<2x128xf32>
    %246 = vector.extract_strided_slice %245 {offsets = [0, 0], sizes = [2, 32], strides = [1, 1]} : vector<2x128xf32> to vector<2x32xf32>
    %247 = vector.extract_strided_slice %245 {offsets = [0, 32], sizes = [2, 32], strides = [1, 1]} : vector<2x128xf32> to vector<2x32xf32>
    %248 = vector.extract_strided_slice %239 {offsets = [0, 64], sizes = [2, 32], strides = [1, 1]} : vector<2x128xf32> to vector<2x32xf32>
    %249 = vector.extract_strided_slice %217 {offsets = [0, 64], sizes = [2, 32], strides = [1, 1]} : vector<2x128xf32> to vector<2x32xf32>
    %250 = arith.mulf %246, %249 : vector<2x32xf32>
    %251 = arith.addf %248, %250 : vector<2x32xf32>
    %252 = math.tanh %251 : vector<2x32xf32>
    %cst_54 = arith.constant 1.000000e+00 : f32
    %253 = vector.broadcast %cst_54 : f32 to vector<2x32xf32>
    %254 = arith.subf %253, %247 : vector<2x32xf32>
    %255 = arith.mulf %254, %252 : vector<2x32xf32>
    %256 = arith.mulf %247, %212 : vector<2x32xf32>
    %257 = arith.addf %255, %256 : vector<2x32xf32>
    %cst_55 = arith.constant dense<0.000000e+00> : vector<2x256xf32>
    %258 = tpu.matmul %257, %0, %cst_55 {dimension_numbers = #tpu.dot_dimension_numbers<[1], [0], [0], [1], [0, 0, 1, 1], [], []>} : vector<2x32xf32>, vector<32x256xf32>, vector<2x256xf32> -> vector<2x256xf32>
    %259 = vector.extract_strided_slice %258 {offsets = [0, 128], sizes = [2, 128], strides = [1, 1]} : vector<2x256xf32> to vector<2x128xf32>
    %260 = arith.addf %259, %7 : vector<2x128xf32>
    %261 = vector.extract_strided_slice %258 {offsets = [0, 0], sizes = [2, 128], strides = [1, 1]} : vector<2x256xf32> to vector<2x128xf32>
    %262 = arith.addf %261, %4 : vector<2x128xf32>
    %263 = arith.addf %260, %237 : vector<2x128xf32>
    %264 = arith.negf %263 : vector<2x128xf32>
    %265 = math.exp %264 : vector<2x128xf32>
    %cst_56 = arith.constant 1.000000e+00 : f32
    %266 = vector.broadcast %cst_56 : f32 to vector<2x128xf32>
    %267 = arith.addf %266, %265 : vector<2x128xf32>
    %268 = arith.divf %266, %267 : vector<2x128xf32>
    %269 = vector.extract_strided_slice %268 {offsets = [0, 0], sizes = [2, 32], strides = [1, 1]} : vector<2x128xf32> to vector<2x32xf32>
    %270 = vector.extract_strided_slice %268 {offsets = [0, 32], sizes = [2, 32], strides = [1, 1]} : vector<2x128xf32> to vector<2x32xf32>
    %271 = vector.extract_strided_slice %260 {offsets = [0, 64], sizes = [2, 32], strides = [1, 1]} : vector<2x128xf32> to vector<2x32xf32>
    %272 = vector.extract_strided_slice %237 {offsets = [0, 64], sizes = [2, 32], strides = [1, 1]} : vector<2x128xf32> to vector<2x32xf32>
    %273 = arith.mulf %269, %272 : vector<2x32xf32>
    %274 = arith.addf %271, %273 : vector<2x32xf32>
    %275 = math.tanh %274 : vector<2x32xf32>
    %cst_57 = arith.constant 1.000000e+00 : f32
    %276 = vector.broadcast %cst_57 : f32 to vector<2x32xf32>
    %277 = arith.subf %276, %270 : vector<2x32xf32>
    %278 = arith.mulf %277, %275 : vector<2x32xf32>
    %279 = arith.mulf %270, %235 : vector<2x32xf32>
    %280 = arith.addf %278, %279 : vector<2x32xf32>
    %cst_58 = arith.constant dense<0.000000e+00> : vector<2x128xf32>
    %281 = tpu.matmul %280, %1, %cst_58 {dimension_numbers = #tpu.dot_dimension_numbers<[1], [0], [0], [1], [0, 0, 1, 1], [], []>} : vector<2x32xf32>, vector<32x128xf32>, vector<2x128xf32> -> vector<2x128xf32>
    %282 = arith.addf %281, %10 : vector<2x128xf32>
    %c6 = arith.constant 6 : index
    %c0_59 = arith.constant 0 : index
    %c0_60 = arith.constant 0 : index
    %283 = vector.load %arg0[%c6, %c0_59, %c0_60] : memref<8x2x128xf32, #tpu.memory_space<vmem>>, vector<1x2x128xf32>
    %284 = vector.shape_cast %283 : vector<1x2x128xf32> to vector<2x128xf32>
    %285 = arith.addf %284, %262 : vector<2x128xf32>
    %286 = arith.negf %285 : vector<2x128xf32>
    %287 = math.exp %286 : vector<2x128xf32>
    %cst_61 = arith.constant 1.000000e+00 : f32
    %288 = vector.broadcast %cst_61 : f32 to vector<2x128xf32>
    %289 = arith.addf %288, %287 : vector<2x128xf32>
    %290 = arith.divf %288, %289 : vector<2x128xf32>
    %291 = vector.extract_strided_slice %290 {offsets = [0, 0], sizes = [2, 32], strides = [1, 1]} : vector<2x128xf32> to vector<2x32xf32>
    %292 = vector.extract_strided_slice %290 {offsets = [0, 32], sizes = [2, 32], strides = [1, 1]} : vector<2x128xf32> to vector<2x32xf32>
    %293 = vector.extract_strided_slice %284 {offsets = [0, 64], sizes = [2, 32], strides = [1, 1]} : vector<2x128xf32> to vector<2x32xf32>
    %294 = vector.extract_strided_slice %262 {offsets = [0, 64], sizes = [2, 32], strides = [1, 1]} : vector<2x128xf32> to vector<2x32xf32>
    %295 = arith.mulf %291, %294 : vector<2x32xf32>
    %296 = arith.addf %293, %295 : vector<2x32xf32>
    %297 = math.tanh %296 : vector<2x32xf32>
    %cst_62 = arith.constant 1.000000e+00 : f32
    %298 = vector.broadcast %cst_62 : f32 to vector<2x32xf32>
    %299 = arith.subf %298, %292 : vector<2x32xf32>
    %300 = arith.mulf %299, %297 : vector<2x32xf32>
    %301 = arith.mulf %292, %257 : vector<2x32xf32>
    %302 = arith.addf %300, %301 : vector<2x32xf32>
    %cst_63 = arith.constant dense<0.000000e+00> : vector<2x256xf32>
    %303 = tpu.matmul %302, %0, %cst_63 {dimension_numbers = #tpu.dot_dimension_numbers<[1], [0], [0], [1], [0, 0, 1, 1], [], []>} : vector<2x32xf32>, vector<32x256xf32>, vector<2x256xf32> -> vector<2x256xf32>
    %304 = vector.extract_strided_slice %303 {offsets = [0, 128], sizes = [2, 128], strides = [1, 1]} : vector<2x256xf32> to vector<2x128xf32>
    %305 = arith.addf %304, %7 : vector<2x128xf32>
    %306 = vector.extract_strided_slice %303 {offsets = [0, 0], sizes = [2, 128], strides = [1, 1]} : vector<2x256xf32> to vector<2x128xf32>
    %307 = arith.addf %306, %4 : vector<2x128xf32>
    %308 = arith.addf %305, %282 : vector<2x128xf32>
    %309 = arith.negf %308 : vector<2x128xf32>
    %310 = math.exp %309 : vector<2x128xf32>
    %cst_64 = arith.constant 1.000000e+00 : f32
    %311 = vector.broadcast %cst_64 : f32 to vector<2x128xf32>
    %312 = arith.addf %311, %310 : vector<2x128xf32>
    %313 = arith.divf %311, %312 : vector<2x128xf32>
    %314 = vector.extract_strided_slice %313 {offsets = [0, 0], sizes = [2, 32], strides = [1, 1]} : vector<2x128xf32> to vector<2x32xf32>
    %315 = vector.extract_strided_slice %313 {offsets = [0, 32], sizes = [2, 32], strides = [1, 1]} : vector<2x128xf32> to vector<2x32xf32>
    %316 = vector.extract_strided_slice %305 {offsets = [0, 64], sizes = [2, 32], strides = [1, 1]} : vector<2x128xf32> to vector<2x32xf32>
    %317 = vector.extract_strided_slice %282 {offsets = [0, 64], sizes = [2, 32], strides = [1, 1]} : vector<2x128xf32> to vector<2x32xf32>
    %318 = arith.mulf %314, %317 : vector<2x32xf32>
    %319 = arith.addf %316, %318 : vector<2x32xf32>
    %320 = math.tanh %319 : vector<2x32xf32>
    %cst_65 = arith.constant 1.000000e+00 : f32
    %321 = vector.broadcast %cst_65 : f32 to vector<2x32xf32>
    %322 = arith.subf %321, %315 : vector<2x32xf32>
    %323 = arith.mulf %322, %320 : vector<2x32xf32>
    %324 = arith.mulf %315, %280 : vector<2x32xf32>
    %325 = arith.addf %323, %324 : vector<2x32xf32>
    %cst_66 = arith.constant dense<0.000000e+00> : vector<2x128xf32>
    %326 = tpu.matmul %325, %1, %cst_66 {dimension_numbers = #tpu.dot_dimension_numbers<[1], [0], [0], [1], [0, 0, 1, 1], [], []>} : vector<2x32xf32>, vector<32x128xf32>, vector<2x128xf32> -> vector<2x128xf32>
    %327 = arith.addf %326, %10 : vector<2x128xf32>
    %c7 = arith.constant 7 : index
    %c0_67 = arith.constant 0 : index
    %c0_68 = arith.constant 0 : index
    %328 = vector.load %arg0[%c7, %c0_67, %c0_68] : memref<8x2x128xf32, #tpu.memory_space<vmem>>, vector<1x2x128xf32>
    %329 = vector.shape_cast %328 : vector<1x2x128xf32> to vector<2x128xf32>
    %330 = arith.addf %329, %307 : vector<2x128xf32>
    %331 = arith.negf %330 : vector<2x128xf32>
    %332 = math.exp %331 : vector<2x128xf32>
    %cst_69 = arith.constant 1.000000e+00 : f32
    %333 = vector.broadcast %cst_69 : f32 to vector<2x128xf32>
    %334 = arith.addf %333, %332 : vector<2x128xf32>
    %335 = arith.divf %333, %334 : vector<2x128xf32>
    %336 = vector.extract_strided_slice %335 {offsets = [0, 0], sizes = [2, 32], strides = [1, 1]} : vector<2x128xf32> to vector<2x32xf32>
    %337 = vector.extract_strided_slice %335 {offsets = [0, 32], sizes = [2, 32], strides = [1, 1]} : vector<2x128xf32> to vector<2x32xf32>
    %338 = vector.extract_strided_slice %329 {offsets = [0, 64], sizes = [2, 32], strides = [1, 1]} : vector<2x128xf32> to vector<2x32xf32>
    %339 = vector.extract_strided_slice %307 {offsets = [0, 64], sizes = [2, 32], strides = [1, 1]} : vector<2x128xf32> to vector<2x32xf32>
    %340 = arith.mulf %336, %339 : vector<2x32xf32>
    %341 = arith.addf %338, %340 : vector<2x32xf32>
    %342 = math.tanh %341 : vector<2x32xf32>
    %cst_70 = arith.constant 1.000000e+00 : f32
    %343 = vector.broadcast %cst_70 : f32 to vector<2x32xf32>
    %344 = arith.subf %343, %337 : vector<2x32xf32>
    %345 = arith.mulf %344, %342 : vector<2x32xf32>
    %346 = arith.mulf %337, %302 : vector<2x32xf32>
    %347 = arith.addf %345, %346 : vector<2x32xf32>
    %cst_71 = arith.constant dense<0.000000e+00> : vector<2x256xf32>
    %348 = tpu.matmul %347, %0, %cst_71 {dimension_numbers = #tpu.dot_dimension_numbers<[1], [0], [0], [1], [0, 0, 1, 1], [], []>} : vector<2x32xf32>, vector<32x256xf32>, vector<2x256xf32> -> vector<2x256xf32>
    %349 = vector.extract_strided_slice %348 {offsets = [0, 128], sizes = [2, 128], strides = [1, 1]} : vector<2x256xf32> to vector<2x128xf32>
    %350 = arith.addf %349, %7 : vector<2x128xf32>
    %351 = arith.addf %350, %327 : vector<2x128xf32>
    %352 = arith.negf %351 : vector<2x128xf32>
    %353 = math.exp %352 : vector<2x128xf32>
    %cst_72 = arith.constant 1.000000e+00 : f32
    %354 = vector.broadcast %cst_72 : f32 to vector<2x128xf32>
    %355 = arith.addf %354, %353 : vector<2x128xf32>
    %356 = arith.divf %354, %355 : vector<2x128xf32>
    %357 = vector.extract_strided_slice %356 {offsets = [0, 0], sizes = [2, 32], strides = [1, 1]} : vector<2x128xf32> to vector<2x32xf32>
    %358 = vector.extract_strided_slice %356 {offsets = [0, 32], sizes = [2, 32], strides = [1, 1]} : vector<2x128xf32> to vector<2x32xf32>
    %359 = vector.extract_strided_slice %350 {offsets = [0, 64], sizes = [2, 32], strides = [1, 1]} : vector<2x128xf32> to vector<2x32xf32>
    %360 = vector.extract_strided_slice %327 {offsets = [0, 64], sizes = [2, 32], strides = [1, 1]} : vector<2x128xf32> to vector<2x32xf32>
    %361 = arith.mulf %357, %360 : vector<2x32xf32>
    %362 = arith.addf %359, %361 : vector<2x32xf32>
    %363 = math.tanh %362 : vector<2x32xf32>
    %cst_73 = arith.constant 1.000000e+00 : f32
    %364 = vector.broadcast %cst_73 : f32 to vector<2x32xf32>
    %365 = arith.subf %364, %358 : vector<2x32xf32>
    %366 = arith.mulf %365, %363 : vector<2x32xf32>
    %367 = arith.mulf %358, %325 : vector<2x32xf32>
    %368 = arith.addf %366, %367 : vector<2x32xf32>
    %c0_74 = arith.constant 0 : index
    %c0_75 = arith.constant 0 : index
    %369 = vector.load %arg6[%c0_74, %c0_75] : memref<32x1xf32, #tpu.memory_space<vmem>>, vector<32x1xf32>
    %cst_76 = arith.constant dense<0.000000e+00> : vector<2x1xf32>
    %370 = tpu.matmul %368, %369, %cst_76 {dimension_numbers = #tpu.dot_dimension_numbers<[1], [0], [0], [1], [0, 0, 1, 1], [], []>} : vector<2x32xf32>, vector<32x1xf32>, vector<2x1xf32> -> vector<2x1xf32>
    %c0_77 = arith.constant 0 : index
    %c0_78 = arith.constant 0 : index
    %371 = vector.load %arg7[%c0_77, %c0_78] : memref<1x1xf32, #tpu.memory_space<vmem>>, vector<1x1xf32>
    %372 = vector.broadcast %371 : vector<1x1xf32> to vector<2x1xf32>
    %373 = arith.addf %370, %372 : vector<2x1xf32>
    %c0_79 = arith.constant 0 : index
    %c0_80 = arith.constant 0 : index
    %374 = vector.load %arg8[%c0_79, %c0_80] : memref<2x1xf32, #tpu.memory_space<vmem>>, vector<2x1xf32>
    tpu.vector_store %arg8[%c0_79, %c0_80], %373 {strides = array<i32>} : memref<2x1xf32, #tpu.memory_space<vmem>>, vector<2x1xf32>,
    return
  }
}

</mosaic_0001>

<llo_original>
// kernel: gru_forward.1
$region0: #{gru_forward.1}
  #allocation0 [shape = 'u32[]', space=smem, size = 0x4, offset = 0x4, fixed_abs, tag = 'smem constant byte address 0x4 - core index']
  #allocation1 [shape = 'u32[144,128]{1,0:T(1,128)}', space=vmem, size = 0x12000, scoped, tag = 'internal scratch']
  #allocation2 [shape = 'f32[1,1]{1,0:T(1,128)S(1)}', space=vmem, size = 0x200, scoped, tag = 'scoped memory for gru_forward.1']
  %s0 = inlined_call_operand.vmem [shape: f32[8,2,128], index: 0, kind: input, shape index: {}]
  %s1 = inlined_call_operand.vmem [shape: f32[32,256], index: 1, kind: input, shape index: {}]
  %s2 = inlined_call_operand.vmem [shape: f32[1,128], index: 2, kind: input, shape index: {}]
  %s3 = inlined_call_operand.vmem [shape: f32[1,128], index: 3, kind: input, shape index: {}]
  %s4 = inlined_call_operand.vmem [shape: f32[32,128], index: 4, kind: input, shape index: {}]
  %s5 = inlined_call_operand.vmem [shape: f32[1,128], index: 5, kind: input, shape index: {}]
  %s6 = inlined_call_operand.vmem [shape: f32[32,1], index: 6, kind: input, shape index: {}]
  %s7 = inlined_call_operand.<no memory space> [shape: f32[1,1], index: 7, kind: input, shape index: {}]
  %s8 = inlined_call_operand.vmem [shape: f32[2,1], index: 8, kind: output, shape index: {}]
  %s9 = sld [smem:[#allocation0]]
  $region42: #{gru_forward.1} parent=0
    _
  %s11 = ssub.s32 1, %s9
  %s12 = scalar_select 0, %s11, %s9
  %v13 = vstv %s7
  %14 = vst [vmem:[#allocation2] sm:$0x1] %v13
  // Predicated region
  $region2: #{gru_forward.1} parent=0 // pred_check
    _
  $region3: #{gru_forward.1} parent=0 // pred_check_branch
    %16 = sbr.rel (0) target = $region5
  $region4: #{gru_forward.1} parent=0 // pred_region
    _
  $region5: #{gru_forward.1} parent=0 // pred_fallthru
    _
  // Predicated region
  $region6: #{gru_forward.1} parent=0 // pred_check
    _
  $region7: #{gru_forward.1} parent=0 // pred_check_branch
    %18 = sbr.rel (0) target = $region9
  $region8: #{gru_forward.1} parent=0 // pred_region
    _
  $region9: #{gru_forward.1} parent=0 // pred_fallthru
    _
  // Predicated region
  $region10: #{gru_forward.1} parent=0 // pred_check
    _
  $region11: #{gru_forward.1} parent=0 // pred_check_branch
    %20 = sbr.rel (0) target = $region13
  $region12: #{gru_forward.1} parent=0 // pred_region
    _
  $region13: #{gru_forward.1} parent=0 // pred_fallthru
    _
  // Predicated region
  $region14: #{gru_forward.1} parent=0 // pred_check
    _
  $region15: #{gru_forward.1} parent=0 // pred_check_branch
    %22 = sbr.rel (0) target = $region17
  $region16: #{gru_forward.1} parent=0 // pred_region
    _
  $region17: #{gru_forward.1} parent=0 // pred_fallthru
    _
  // Predicated region
  $region18: #{gru_forward.1} parent=0 // pred_check
    _
  $region19: #{gru_forward.1} parent=0 // pred_check_branch
    %24 = sbr.rel (0) target = $region21
  $region20: #{gru_forward.1} parent=0 // pred_region
    _
  $region21: #{gru_forward.1} parent=0 // pred_fallthru
    _
  // Predicated region
  $region22: #{gru_forward.1} parent=0 // pred_check
    _
  $region23: #{gru_forward.1} parent=0 // pred_check_branch
    %26 = sbr.rel (0) target = $region25
  $region24: #{gru_forward.1} parent=0 // pred_region
    _
  $region25: #{gru_forward.1} parent=0 // pred_fallthru
    _
  // Predicated region
  $region26: #{gru_forward.1} parent=0 // pred_check
    _
  $region27: #{gru_forward.1} parent=0 // pred_check_branch
    %28 = sbr.rel (0) target = $region29
  $region28: #{gru_forward.1} parent=0 // pred_region
    _
  $region29: #{gru_forward.1} parent=0 // pred_fallthru
    _
  // Predicated region
  $region30: #{gru_forward.1} parent=0 // pred_check
    _
  $region31: #{gru_forward.1} parent=0 // pred_check_branch
    %30 = sbr.rel (0) target = $region33
  $region32: #{gru_forward.1} parent=0 // pred_region
    _
  $region33: #{gru_forward.1} parent=0 // pred_fallthru
    _
  %v31 = vld [vmem:[%s1] sm:$0xff]
  %v32 = vld [vmem:[%s1 + $0x8] sm:$0xff]
  %v33 = vld [vmem:[%s1 + $0x10] sm:$0xff]
  %v34 = vld [vmem:[%s1 + $0x18] sm:$0xff]
  %v35 = vld [vmem:[%s1 + $0x20] sm:$0xff]
  %v36 = vld [vmem:[%s1 + $0x28] sm:$0xff]
  %v37 = vld [vmem:[%s1 + $0x30] sm:$0xff]
  %v38 = vld [vmem:[%s1 + $0x38] sm:$0xff]
  %v39 = vld [vmem:[%s4] sm:$0xff]
  %v40 = vld [vmem:[%s4 + $0x8] sm:$0xff]
  %v41 = vld [vmem:[%s4 + $0x10] sm:$0xff]
  %v42 = vld [vmem:[%s4 + $0x18] sm:$0xff]
  %v43 = vld [vmem:[%s2] sm:$0x1]
  %v45 = vlaneseq
  %v46 = vshrl.u32 %v45, 7
  %v47 = vsub.s32 0, %v46
  %v48 = vrot.slane %v43, %v47
  %v50 = vld [vmem:[%s3] sm:$0x1]
  %v52 = vlaneseq
  %v53 = vshrl.u32 %v52, 7
  %v54 = vsub.s32 0, %v53
  %v55 = vrot.slane %v50, %v54
  %v57 = vld [vmem:[%s5] sm:$0x1]
  %v59 = vlaneseq
  %v60 = vshrl.u32 %v59, 7
  %v61 = vsub.s32 0, %v60
  %v62 = vrot.slane %v57, %v61
  %v64 = vld [vmem:[%s0] sm:$0x3]
  %v65 = vadd.f32 %v64, %v48
  %v66 = vxor.u32 %v65, 2147483648
  %v67 = vmul.f32 %v66, 1.442695
  %v68 = vpow.pop %v67
  %v69 = vadd.f32 %v68, 1.0
  %v70 = vrcp.pop %v69
  %v71 = vmul.f32 1.0, %v70
  %72 = vrot.lane.b32.xlu0 %v48, 64
  %v73 = vpop.permute.xlu0 %72
  %v75 = vmul.f32 %v71, %v73
  %77 = vrot.lane.b32.xlu0 %v75, 64
  %v78 = vpop.permute.xlu0 %77
  %v80 = vadd.f32 %v64, %v78
  %v81 = vtanh.pop %v80
  %v82 = vsub.f32 1.0, %v71
  %84 = vrot.lane.b32.xlu0 %v81, 96
  %v85 = vpop.permute.xlu0 %84
  %v87 = vmul.f32 %v82, %v85
  %v88 = vmul.f32 %v71, 0.0
  %v89 = vadd.f32 %v87, %v88
  %91 = vrot.lane.b32.xlu0 %v89, 96
  %v92 = vpop.permute.xlu0 %91
  %vm93 = vcmask 261120
  %v94 = vsel %vm93, %v92, 0
  %96 = vmatprep.subr.mxu0 %v32
  %97 = vmatpush1.msra.mxu0 %v31
  %98 = vmatprep.subr.mxu0 %v34
  %99 = vmatpush1.msra.mxu0 %v33
  %100 = vmatprep.subr.mxu0 %v36
  %101 = vmatpush1.msra.mxu0 %v35
  %102 = vmatprep.subr.mxu0 %v38
  %103 = vmatpush1.msra.mxu0 %v37
  %104 = vmatprep.subr.mxu0 0.0
  %105 = vmatpush1.msra.mxu0 0.0
  %106 = vmatprep.subr.mxu0 0.0
  %107 = vmatpush1.msra.mxu0 0.0
  %108 = vmatprep.subr.mxu0 0.0
  %109 = vmatpush1.msra.mxu0 0.0
  %110 = vmatprep.subr.mxu0 0.0
  %111 = vmatpush1.msra.mxu0 0.0
  %112 = vmatprep.subr.mxu0 0.0
  %113 = vmatpush1.msra.mxu0 0.0
  %114 = vmatprep.subr.mxu0 0.0
  %115 = vmatpush1.msra.mxu0 0.0
  %116 = vmatprep.subr.mxu0 0.0
  %117 = vmatpush1.msra.mxu0 0.0
  %118 = vmatprep.subr.mxu0 0.0
  %119 = vmatpush1.msra.mxu0 0.0
  %120 = vmatprep.subr.mxu0 0.0
  %121 = vmatpush1.msra.mxu0 0.0
  %122 = vmatprep.subr.mxu0 0.0
  %123 = vmatpush1.msra.mxu0 0.0
  %124 = vmatprep.subr.mxu0 0.0
  %125 = vmatpush1.msra.mxu0 0.0
  %126 = vmatprep.subr.mxu0 0.0
  %127 = vmatpush1.msra.mxu0 0.0
  %128 = vmatprep.subr.mxu0 0.0
  %129 = vmatpush1.msra.mxu0 0.0
  %130 = vmatprep.subr.mxu0 0.0
  %131 = vmatpush1.msra.mxu0 0.0
  %132 = vmatprep.subr.mxu0 0.0
  %133 = vmatpush1.msra.mxu0 0.0
  %134 = vmatprep.subr.mxu0 0.0
  %135 = vmatpush1.msra.mxu0 0.0
  %136 = vmatprep.subr.mxu0 0.0
  %137 = vmatpush1.msra.mxu0 0.0
  %138 = vmatprep.subr.mxu0 0.0
  %139 = vmatpush1.msra.mxu0 0.0
  %140 = vmatprep.subr.mxu0 0.0
  %141 = vmatpush1.msra.mxu0 0.0
  %142 = vmatprep.subr.mxu0 0.0
  %143 = vmatpush1.msra.mxu0 0.0
  %144 = vmatprep.subr.mxu0 0.0
  %145 = vmatpush1.msra.mxu0 0.0
  %146 = vmatprep.subr.mxu0 0.0
  %147 = vmatpush1.msra.mxu0 0.0
  %148 = vmatprep.subr.mxu0 0.0
  %149 = vmatpush1.msra.mxu0 0.0
  %150 = vmatprep.subr.mxu0 0.0
  %151 = vmatpush1.msra.mxu0 0.0
  %152 = vmatprep.subr.mxu0 0.0
  %153 = vmatpush1.msra.mxu0 0.0
  %154 = vmatprep.subr.mxu0 0.0
  %155 = vmatpush1.msra.mxu0 0.0
  %156 = vmatprep.subr.mxu0 0.0
  %157 = vmatpush1.msra.mxu0 0.0
  %158 = vmatprep.subr.mxu0 0.0
  %159 = vmatpush1.msra.mxu0 0.0
  %160 = vmatprep.mubr.f32.mxu0 0.0
  %161 = vmatmul.mubr.f32.gmra.mrb[0].mxu0 %v94
  %v162 = vpop.f32.mrb[0].mxu0
  %v163 = vadd.f32 0.0, %v162
  %v164 = vpop.f32.mrb[0].mxu0
  %v165 = vadd.f32 0.0, %v164
  %166 = vdwg.mxu0
  %v167 = vadd.f32 %v165, %v55
  %v168 = vadd.f32 %v163, %v48
  %v169 = vadd.f32 %v167, %v62
  %v170 = vxor.u32 %v169, 2147483648
  %v171 = vmul.f32 %v170, 1.442695
  %v172 = vpow.pop %v171
  %v173 = vadd.f32 %v172, 1.0
  %v174 = vrcp.pop %v173
  %v175 = vmul.f32 1.0, %v174
  %176 = vrot.lane.b32.xlu0 %v62, 64
  %v177 = vpop.permute.xlu0 %176
  %v179 = vmul.f32 %v175, %v177
  %181 = vrot.lane.b32.xlu0 %v179, 64
  %v182 = vpop.permute.xlu0 %181
  %v184 = vadd.f32 %v167, %v182
  %v185 = vtanh.pop %v184
  %v186 = vsub.f32 1.0, %v175
  %188 = vrot.lane.b32.xlu0 %v185, 96
  %v189 = vpop.permute.xlu0 %188
  %v191 = vmul.f32 %v186, %v189
  %v192 = vmul.f32 %v175, 0.0
  %v193 = vadd.f32 %v191, %v192
  %195 = vrot.lane.b32.xlu0 %v193, 96
  %v196 = vpop.permute.xlu0 %195
  %v197 = vsel %vm93, %v196, 0
  %199 = vmatprep.subr.mxu0 0.0
  %200 = vmatpush1.msra.mxu0 %v39
  %201 = vmatprep.subr.mxu0 0.0
  %202 = vmatpush1.msra.mxu0 %v40
  %203 = vmatprep.subr.mxu0 0.0
  %204 = vmatpush1.msra.mxu0 %v41
  %205 = vmatprep.subr.mxu0 0.0
  %206 = vmatpush1.msra.mxu0 %v42
  %207 = vmatprep.subr.mxu0 0.0
  %208 = vmatpush1.msra.mxu0 0.0
  %209 = vmatprep.subr.mxu0 0.0
  %210 = vmatpush1.msra.mxu0 0.0
  %211 = vmatprep.subr.mxu0 0.0
  %212 = vmatpush1.msra.mxu0 0.0
  %213 = vmatprep.subr.mxu0 0.0
  %214 = vmatpush1.msra.mxu0 0.0
  %215 = vmatprep.subr.mxu0 0.0
  %216 = vmatpush1.msra.mxu0 0.0
  %217 = vmatprep.subr.mxu0 0.0
  %218 = vmatpush1.msra.mxu0 0.0
  %219 = vmatprep.subr.mxu0 0.0
  %220 = vmatpush1.msra.mxu0 0.0
  %221 = vmatprep.subr.mxu0 0.0
  %222 = vmatpush1.msra.mxu0 0.0
  %223 = vmatprep.subr.mxu0 0.0
  %224 = vmatpush1.msra.mxu0 0.0
  %225 = vmatprep.subr.mxu0 0.0
  %226 = vmatpush1.msra.mxu0 0.0
  %227 = vmatprep.subr.mxu0 0.0
  %228 = vmatpush1.msra.mxu0 0.0
  %229 = vmatprep.subr.mxu0 0.0
  %230 = vmatpush1.msra.mxu0 0.0
  %231 = vmatprep.subr.mxu0 0.0
  %232 = vmatpush1.msra.mxu0 0.0
  %233 = vmatprep.subr.mxu0 0.0
  %234 = vmatpush1.msra.mxu0 0.0
  %235 = vmatprep.subr.mxu0 0.0
  %236 = vmatpush1.msra.mxu0 0.0
  %237 = vmatprep.subr.mxu0 0.0
  %238 = vmatpush1.msra.mxu0 0.0
  %239 = vmatprep.subr.mxu0 0.0
  %240 = vmatpush1.msra.mxu0 0.0
  %241 = vmatprep.subr.mxu0 0.0
  %242 = vmatpush1.msra.mxu0 0.0
  %243 = vmatprep.subr.mxu0 0.0
  %244 = vmatpush1.msra.mxu0 0.0
  %245 = vmatprep.subr.mxu0 0.0
  %246 = vmatpush1.msra.mxu0 0.0
  %247 = vmatprep.subr.mxu0 0.0
  %248 = vmatpush1.msra.mxu0 0.0
  %249 = vmatprep.subr.mxu0 0.0
  %250 = vmatpush1.msra.mxu0 0.0
  %251 = vmatprep.subr.mxu0 0.0
  %252 = vmatpush1.msra.mxu0 0.0
  %253 = vmatprep.subr.mxu0 0.0
  %254 = vmatpush1.msra.mxu0 0.0
  %255 = vmatprep.subr.mxu0 0.0
  %256 = vmatpush1.msra.mxu0 0.0
  %257 = vmatprep.subr.mxu0 0.0
  %258 = vmatpush1.msra.mxu0 0.0
  %259 = vmatprep.subr.mxu0 0.0
  %260 = vmatpush1.msra.mxu0 0.0
  %261 = vmatprep.subr.mxu0 0.0
  %262 = vmatpush1.msra.mxu0 0.0
  %263 = vmatprep.mubr.f32.mxu0 0.0
  %264 = vmatmul.mubr.f32.gmra.mrb[0].mxu0 %v197
  %v265 = vpop.f32.mrb[0].mxu0
  %v266 = vadd.f32 %v62, %v265
  %v267 = vpop.f32.mrb[0].mxu0
  %268 = vdwg.mxu0
  %s269 = scalar_lea.vmem %s0, 2
  %v270 = vld [vmem:[%s269] sm:$0x3]
  %v271 = vadd.f32 %v270, %v168
  %v272 = vxor.u32 %v271, 2147483648
  %v273 = vmul.f32 %v272, 1.442695
  %v274 = vpow.pop %v273
  %v275 = vadd.f32 %v274, 1.0
  %v276 = vrcp.pop %v275
  %v277 = vmul.f32 1.0, %v276
  %279 = vrot.lane.b32.xlu0 %v168, 64
  %v280 = vpop.permute.xlu0 %279
  %v282 = vmul.f32 %v277, %v280
  %284 = vrot.lane.b32.xlu0 %v282, 64
  %v285 = vpop.permute.xlu0 %284
  %v287 = vadd.f32 %v270, %v285
  %v288 = vtanh.pop %v287
  %v289 = vsub.f32 1.0, %v277
  %291 = vrot.lane.b32.xlu0 %v288, 96
  %v292 = vpop.permute.xlu0 %291
  %v294 = vmul.f32 %v289, %v292
  %v295 = vmul.f32 %v277, %v89
  %v296 = vadd.f32 %v294, %v295
  %298 = vrot.lane.b32.xlu0 %v296, 96
  %v299 = vpop.permute.xlu0 %298
  %v300 = vsel %vm93, %v299, 0
  %302 = vmatprep.subr.mxu0 %v32
  %303 = vmatpush1.msra.mxu0 %v31
  %304 = vmatprep.subr.mxu0 %v34
  %305 = vmatpush1.msra.mxu0 %v33
  %306 = vmatprep.subr.mxu0 %v36
  %307 = vmatpush1.msra.mxu0 %v35
  %308 = vmatprep.subr.mxu0 %v38
  %309 = vmatpush1.msra.mxu0 %v37
  %310 = vmatprep.subr.mxu0 0.0
  %311 = vmatpush1.msra.mxu0 0.0
  %312 = vmatprep.subr.mxu0 0.0
  %313 = vmatpush1.msra.mxu0 0.0
  %314 = vmatprep.subr.mxu0 0.0
  %315 = vmatpush1.msra.mxu0 0.0
  %316 = vmatprep.subr.mxu0 0.0
  %317 = vmatpush1.msra.mxu0 0.0
  %318 = vmatprep.subr.mxu0 0.0
  %319 = vmatpush1.msra.mxu0 0.0
  %320 = vmatprep.subr.mxu0 0.0
  %321 = vmatpush1.msra.mxu0 0.0
  %322 = vmatprep.subr.mxu0 0.0
  %323 = vmatpush1.msra.mxu0 0.0
  %324 = vmatprep.subr.mxu0 0.0
  %325 = vmatpush1.msra.mxu0 0.0
  %326 = vmatprep.subr.mxu0 0.0
  %327 = vmatpush1.msra.mxu0 0.0
  %328 = vmatprep.subr.mxu0 0.0
  %329 = vmatpush1.msra.mxu0 0.0
  %330 = vmatprep.subr.mxu0 0.0
  %331 = vmatpush1.msra.mxu0 0.0
  %332 = vmatprep.subr.mxu0 0.0
  %333 = vmatpush1.msra.mxu0 0.0
  %334 = vmatprep.subr.mxu0 0.0
  %335 = vmatpush1.msra.mxu0 0.0
  %336 = vmatprep.subr.mxu0 0.0
  %337 = vmatpush1.msra.mxu0 0.0
  %338 = vmatprep.subr.mxu0 0.0
  %339 = vmatpush1.msra.mxu0 0.0
  %340 = vmatprep.subr.mxu0 0.0
  %341 = vmatpush1.msra.mxu0 0.0
  %342 = vmatprep.subr.mxu0 0.0
  %343 = vmatpush1.msra.mxu0 0.0
  %344 = vmatprep.subr.mxu0 0.0
  %345 = vmatpush1.msra.mxu0 0.0
  %346 = vmatprep.subr.mxu0 0.0
  %347 = vmatpush1.msra.mxu0 0.0
  %348 = vmatprep.subr.mxu0 0.0
  %349 = vmatpush1.msra.mxu0 0.0
  %350 = vmatprep.subr.mxu0 0.0
  %351 = vmatpush1.msra.mxu0 0.0
  %352 = vmatprep.subr.mxu0 0.0
  %353 = vmatpush1.msra.mxu0 0.0
  %354 = vmatprep.subr.mxu0 0.0
  %355 = vmatpush1.msra.mxu0 0.0
  %356 = vmatprep.subr.mxu0 0.0
  %357 = vmatpush1.msra.mxu0 0.0
  %358 = vmatprep.subr.mxu0 0.0
  %359 = vmatpush1.msra.mxu0 0.0
  %360 = vmatprep.subr.mxu0 0.0
  %361 = vmatpush1.msra.mxu0 0.0
  %362 = vmatprep.subr.mxu0 0.0
  %363 = vmatpush1.msra.mxu0 0.0
  %364 = vmatprep.subr.mxu0 0.0
  %365 = vmatpush1.msra.mxu0 0.0
  %366 = vmatprep.mubr.f32.mxu0 0.0
  %367 = vmatmul.mubr.f32.gmra.mrb[0].mxu0 %v300
  %v368 = vpop.f32.mrb[0].mxu0
  %v369 = vadd.f32 0.0, %v368
  %v370 = vpop.f32.mrb[0].mxu0
  %v371 = vadd.f32 0.0, %v370
  %372 = vdwg.mxu0
  %v373 = vadd.f32 %v371, %v55
  %v374 = vadd.f32 %v369, %v48
  %v375 = vadd.f32 %v373, %v266
  %v376 = vxor.u32 %v375, 2147483648
  %v377 = vmul.f32 %v376, 1.442695
  %v378 = vpow.pop %v377
  %v379 = vadd.f32 %v378, 1.0
  %v380 = vrcp.pop %v379
  %v381 = vmul.f32 1.0, %v380
  %383 = vrot.lane.b32.xlu0 %v266, 64
  %v384 = vpop.permute.xlu0 %383
  %v386 = vmul.f32 %v381, %v384
  %388 = vrot.lane.b32.xlu0 %v386, 64
  %v389 = vpop.permute.xlu0 %388
  %v391 = vadd.f32 %v373, %v389
  %v392 = vtanh.pop %v391
  %v393 = vsub.f32 1.0, %v381
  %395 = vrot.lane.b32.xlu0 %v392, 96
  %v396 = vpop.permute.xlu0 %395
  %v398 = vmul.f32 %v393, %v396
  %v399 = vmul.f32 %v381, %v193
  %v400 = vadd.f32 %v398, %v399
  %402 = vrot.lane.b32.xlu0 %v400, 96
  %v403 = vpop.permute.xlu0 %402
  %v404 = vsel %vm93, %v403, 0
  %406 = vmatprep.subr.mxu0 0.0
  %407 = vmatpush1.msra.mxu0 %v39
  %408 = vmatprep.subr.mxu0 0.0
  %409 = vmatpush1.msra.mxu0 %v40
  %410 = vmatprep.subr.mxu0 0.0
  %411 = vmatpush1.msra.mxu0 %v41
  %412 = vmatprep.subr.mxu0 0.0
  %413 = vmatpush1.msra.mxu0 %v42
  %414 = vmatprep.subr.mxu0 0.0
  %415 = vmatpush1.msra.mxu0 0.0
  %416 = vmatprep.subr.mxu0 0.0
  %417 = vmatpush1.msra.mxu0 0.0
  %418 = vmatprep.subr.mxu0 0.0
  %419 = vmatpush1.msra.mxu0 0.0
  %420 = vmatprep.subr.mxu0 0.0
  %421 = vmatpush1.msra.mxu0 0.0
  %422 = vmatprep.subr.mxu0 0.0
  %423 = vmatpush1.msra.mxu0 0.0
  %424 = vmatprep.subr.mxu0 0.0
  %425 = vmatpush1.msra.mxu0 0.0
  %426 = vmatprep.subr.mxu0 0.0
  %427 = vmatpush1.msra.mxu0 0.0
  %428 = vmatprep.subr.mxu0 0.0
  %429 = vmatpush1.msra.mxu0 0.0
  %430 = vmatprep.subr.mxu0 0.0
  %431 = vmatpush1.msra.mxu0 0.0
  %432 = vmatprep.subr.mxu0 0.0
  %433 = vmatpush1.msra.mxu0 0.0
  %434 = vmatprep.subr.mxu0 0.0
  %435 = vmatpush1.msra.mxu0 0.0
  %436 = vmatprep.subr.mxu0 0.0
  %437 = vmatpush1.msra.mxu0 0.0
  %438 = vmatprep.subr.mxu0 0.0
  %439 = vmatpush1.msra.mxu0 0.0
  %440 = vmatprep.subr.mxu0 0.0
  %441 = vmatpush1.msra.mxu0 0.0
  %442 = vmatprep.subr.mxu0 0.0
  %443 = vmatpush1.msra.mxu0 0.0
  %444 = vmatprep.subr.mxu0 0.0
  %445 = vmatpush1.msra.mxu0 0.0
  %446 = vmatprep.subr.mxu0 0.0
  %447 = vmatpush1.msra.mxu0 0.0
  %448 = vmatprep.subr.mxu0 0.0
  %449 = vmatpush1.msra.mxu0 0.0
  %450 = vmatprep.subr.mxu0 0.0
  %451 = vmatpush1.msra.mxu0 0.0
  %452 = vmatprep.subr.mxu0 0.0
  %453 = vmatpush1.msra.mxu0 0.0
  %454 = vmatprep.subr.mxu0 0.0
  %455 = vmatpush1.msra.mxu0 0.0
  %456 = vmatprep.subr.mxu0 0.0
  %457 = vmatpush1.msra.mxu0 0.0
  %458 = vmatprep.subr.mxu0 0.0
  %459 = vmatpush1.msra.mxu0 0.0
  %460 = vmatprep.subr.mxu0 0.0
  %461 = vmatpush1.msra.mxu0 0.0
  %462 = vmatprep.subr.mxu0 0.0
  %463 = vmatpush1.msra.mxu0 0.0
  %464 = vmatprep.subr.mxu0 0.0
  %465 = vmatpush1.msra.mxu0 0.0
  %466 = vmatprep.subr.mxu0 0.0
  %467 = vmatpush1.msra.mxu0 0.0
  %468 = vmatprep.subr.mxu0 0.0
  %469 = vmatpush1.msra.mxu0 0.0
  %470 = vmatprep.mubr.f32.mxu0 0.0
  %471 = vmatmul.mubr.f32.gmra.mrb[0].mxu0 %v404
  %v472 = vpop.f32.mrb[0].mxu0
  %v473 = vadd.f32 %v62, %v472
  %v474 = vpop.f32.mrb[0].mxu0
  %475 = vdwg.mxu0
  %s476 = scalar_lea.vmem %s0, 4
  %v477 = vld [vmem:[%s476] sm:$0x3]
  %v478 = vadd.f32 %v477, %v374
  %v479 = vxor.u32 %v478, 2147483648
  %v480 = vmul.f32 %v479, 1.442695
  %v481 = vpow.pop %v480
  %v482 = vadd.f32 %v481, 1.0
  %v483 = vrcp.pop %v482
  %v484 = vmul.f32 1.0, %v483
  %486 = vrot.lane.b32.xlu0 %v374, 64
  %v487 = vpop.permute.xlu0 %486
  %v489 = vmul.f32 %v484, %v487
  %491 = vrot.lane.b32.xlu0 %v489, 64
  %v492 = vpop.permute.xlu0 %491
  %v494 = vadd.f32 %v477, %v492
  %v495 = vtanh.pop %v494
  %v496 = vsub.f32 1.0, %v484
  %498 = vrot.lane.b32.xlu0 %v495, 96
  %v499 = vpop.permute.xlu0 %498
  %v501 = vmul.f32 %v496, %v499
  %v502 = vmul.f32 %v484, %v296
  %v503 = vadd.f32 %v501, %v502
  %505 = vrot.lane.b32.xlu0 %v503, 96
  %v506 = vpop.permute.xlu0 %505
  %v507 = vsel %vm93, %v506, 0
  %509 = vmatprep.subr.mxu0 %v32
  %510 = vmatpush1.msra.mxu0 %v31
  %511 = vmatprep.subr.mxu0 %v34
  %512 = vmatpush1.msra.mxu0 %v33
  %513 = vmatprep.subr.mxu0 %v36
  %514 = vmatpush1.msra.mxu0 %v35
  %515 = vmatprep.subr.mxu0 %v38
  %516 = vmatpush1.msra.mxu0 %v37
  %517 = vmatprep.subr.mxu0 0.0
  %518 = vmatpush1.msra.mxu0 0.0
  %519 = vmatprep.subr.mxu0 0.0
  %520 = vmatpush1.msra.mxu0 0.0
  %521 = vmatprep.subr.mxu0 0.0
  %522 = vmatpush1.msra.mxu0 0.0
  %523 = vmatprep.subr.mxu0 0.0
  %524 = vmatpush1.msra.mxu0 0.0
  %525 = vmatprep.subr.mxu0 0.0
  %526 = vmatpush1.msra.mxu0 0.0
  %527 = vmatprep.subr.mxu0 0.0
  %528 = vmatpush1.msra.mxu0 0.0
  %529 = vmatprep.subr.mxu0 0.0
  %530 = vmatpush1.msra.mxu0 0.0
  %531 = vmatprep.subr.mxu0 0.0
  %532 = vmatpush1.msra.mxu0 0.0
  %533 = vmatprep.subr.mxu0 0.0
  %534 = vmatpush1.msra.mxu0 0.0
  %535 = vmatprep.subr.mxu0 0.0
  %536 = vmatpush1.msra.mxu0 0.0
  %537 = vmatprep.subr.mxu0 0.0
  %538 = vmatpush1.msra.mxu0 0.0
  %539 = vmatprep.subr.mxu0 0.0
  %540 = vmatpush1.msra.mxu0 0.0
  %541 = vmatprep.subr.mxu0 0.0
  %542 = vmatpush1.msra.mxu0 0.0
  %543 = vmatprep.subr.mxu0 0.0
  %544 = vmatpush1.msra.mxu0 0.0
  %545 = vmatprep.subr.mxu0 0.0
  %546 = vmatpush1.msra.mxu0 0.0
  %547 = vmatprep.subr.mxu0 0.0
  %548 = vmatpush1.msra.mxu0 0.0
  %549 = vmatprep.subr.mxu0 0.0
  %550 = vmatpush1.msra.mxu0 0.0
  %551 = vmatprep.subr.mxu0 0.0
  %552 = vmatpush1.msra.mxu0 0.0
  %553 = vmatprep.subr.mxu0 0.0
  %554 = vmatpush1.msra.mxu0 0.0
  %555 = vmatprep.subr.mxu0 0.0
  %556 = vmatpush1.msra.mxu0 0.0
  %557 = vmatprep.subr.mxu0 0.0
  %558 = vmatpush1.msra.mxu0 0.0
  %559 = vmatprep.subr.mxu0 0.0
  %560 = vmatpush1.msra.mxu0 0.0
  %561 = vmatprep.subr.mxu0 0.0
  %562 = vmatpush1.msra.mxu0 0.0
  %563 = vmatprep.subr.mxu0 0.0
  %564 = vmatpush1.msra.mxu0 0.0
  %565 = vmatprep.subr.mxu0 0.0
  %566 = vmatpush1.msra.mxu0 0.0
  %567 = vmatprep.subr.mxu0 0.0
  %568 = vmatpush1.msra.mxu0 0.0
  %569 = vmatprep.subr.mxu0 0.0
  %570 = vmatpush1.msra.mxu0 0.0
  %571 = vmatprep.subr.mxu0 0.0
  %572 = vmatpush1.msra.mxu0 0.0
  %573 = vmatprep.mubr.f32.mxu0 0.0
  %574 = vmatmul.mubr.f32.gmra.mrb[0].mxu0 %v507
  %v575 = vpop.f32.mrb[0].mxu0
  %v576 = vadd.f32 0.0, %v575
  %v577 = vpop.f32.mrb[0].mxu0
  %v578 = vadd.f32 0.0, %v577
  %579 = vdwg.mxu0
  %v580 = vadd.f32 %v578, %v55
  %v581 = vadd.f32 %v576, %v48
  %v582 = vadd.f32 %v580, %v473
  %v583 = vxor.u32 %v582, 2147483648
  %v584 = vmul.f32 %v583, 1.442695
  %v585 = vpow.pop %v584
  %v586 = vadd.f32 %v585, 1.0
  %v587 = vrcp.pop %v586
  %v588 = vmul.f32 1.0, %v587
  %590 = vrot.lane.b32.xlu0 %v473, 64
  %v591 = vpop.permute.xlu0 %590
  %v593 = vmul.f32 %v588, %v591
  %595 = vrot.lane.b32.xlu0 %v593, 64
  %v596 = vpop.permute.xlu0 %595
  %v598 = vadd.f32 %v580, %v596
  %v599 = vtanh.pop %v598
  %v600 = vsub.f32 1.0, %v588
  %602 = vrot.lane.b32.xlu0 %v599, 96
  %v603 = vpop.permute.xlu0 %602
  %v605 = vmul.f32 %v600, %v603
  %v606 = vmul.f32 %v588, %v400
  %v607 = vadd.f32 %v605, %v606
  %609 = vrot.lane.b32.xlu0 %v607, 96
  %v610 = vpop.permute.xlu0 %609
  %v611 = vsel %vm93, %v610, 0
  %613 = vmatprep.subr.mxu0 0.0
  %614 = vmatpush1.msra.mxu0 %v39
  %615 = vmatprep.subr.mxu0 0.0
  %616 = vmatpush1.msra.mxu0 %v40
  %617 = vmatprep.subr.mxu0 0.0
  %618 = vmatpush1.msra.mxu0 %v41
  %619 = vmatprep.subr.mxu0 0.0
  %620 = vmatpush1.msra.mxu0 %v42
  %621 = vmatprep.subr.mxu0 0.0
  %622 = vmatpush1.msra.mxu0 0.0
  %623 = vmatprep.subr.mxu0 0.0
  %624 = vmatpush1.msra.mxu0 0.0
  %625 = vmatprep.subr.mxu0 0.0
  %626 = vmatpush1.msra.mxu0 0.0
  %627 = vmatprep.subr.mxu0 0.0
  %628 = vmatpush1.msra.mxu0 0.0
  %629 = vmatprep.subr.mxu0 0.0
  %630 = vmatpush1.msra.mxu0 0.0
  %631 = vmatprep.subr.mxu0 0.0
  %632 = vmatpush1.msra.mxu0 0.0
  %633 = vmatprep.subr.mxu0 0.0
  %634 = vmatpush1.msra.mxu0 0.0
  %635 = vmatprep.subr.mxu0 0.0
  %636 = vmatpush1.msra.mxu0 0.0
  %637 = vmatprep.subr.mxu0 0.0
  %638 = vmatpush1.msra.mxu0 0.0
  %639 = vmatprep.subr.mxu0 0.0
  %640 = vmatpush1.msra.mxu0 0.0
  %641 = vmatprep.subr.mxu0 0.0
  %642 = vmatpush1.msra.mxu0 0.0
  %643 = vmatprep.subr.mxu0 0.0
  %644 = vmatpush1.msra.mxu0 0.0
  %645 = vmatprep.subr.mxu0 0.0
  %646 = vmatpush1.msra.mxu0 0.0
  %647 = vmatprep.subr.mxu0 0.0
  %648 = vmatpush1.msra.mxu0 0.0
  %649 = vmatprep.subr.mxu0 0.0
  %650 = vmatpush1.msra.mxu0 0.0
  %651 = vmatprep.subr.mxu0 0.0
  %652 = vmatpush1.msra.mxu0 0.0
  %653 = vmatprep.subr.mxu0 0.0
  %654 = vmatpush1.msra.mxu0 0.0
  %655 = vmatprep.subr.mxu0 0.0
  %656 = vmatpush1.msra.mxu0 0.0
  %657 = vmatprep.subr.mxu0 0.0
  %658 = vmatpush1.msra.mxu0 0.0
  %659 = vmatprep.subr.mxu0 0.0
  %660 = vmatpush1.msra.mxu0 0.0
  %661 = vmatprep.subr.mxu0 0.0
  %662 = vmatpush1.msra.mxu0 0.0
  %663 = vmatprep.subr.mxu0 0.0
  %664 = vmatpush1.msra.mxu0 0.0
  %665 = vmatprep.subr.mxu0 0.0
  %666 = vmatpush1.msra.mxu0 0.0
  %667 = vmatprep.subr.mxu0 0.0
  %668 = vmatpush1.msra.mxu0 0.0
  %669 = vmatprep.subr.mxu0 0.0
  %670 = vmatpush1.msra.mxu0 0.0
  %671 = vmatprep.subr.mxu0 0.0
  %672 = vmatpush1.msra.mxu0 0.0
  %673 = vmatprep.subr.mxu0 0.0
  %674 = vmatpush1.msra.mxu0 0.0
  %675 = vmatprep.subr.mxu0 0.0
  %676 = vmatpush1.msra.mxu0 0.0
  %677 = vmatprep.mubr.f32.mxu0 0.0
  %678 = vmatmul.mubr.f32.gmra.mrb[0].mxu0 %v611
  %v679 = vpop.f32.mrb[0].mxu0
  %v680 = vadd.f32 %v62, %v679
  %v681 = vpop.f32.mrb[0].mxu0
  %682 = vdwg.mxu0
  %s683 = scalar_lea.vmem %s0, 6
  %v684 = vld [vmem:[%s683] sm:$0x3]
  %v685 = vadd.f32 %v684, %v581
  %v686 = vxor.u32 %v685, 2147483648
  %v687 = vmul.f32 %v686, 1.442695
  %v688 = vpow.pop %v687
  %v689 = vadd.f32 %v688, 1.0
  %v690 = vrcp.pop %v689
  %v691 = vmul.f32 1.0, %v690
  %693 = vrot.lane.b32.xlu0 %v581, 64
  %v694 = vpop.permute.xlu0 %693
  %v696 = vmul.f32 %v691, %v694
  %698 = vrot.lane.b32.xlu0 %v696, 64
  %v699 = vpop.permute.xlu0 %698
  %v701 = vadd.f32 %v684, %v699
  %v702 = vtanh.pop %v701
  %v703 = vsub.f32 1.0, %v691
  %705 = vrot.lane.b32.xlu0 %v702, 96
  %v706 = vpop.permute.xlu0 %705
  %v708 = vmul.f32 %v703, %v706
  %v709 = vmul.f32 %v691, %v503
  %v710 = vadd.f32 %v708, %v709
  %712 = vrot.lane.b32.xlu0 %v710, 96
  %v713 = vpop.permute.xlu0 %712
  %v714 = vsel %vm93, %v713, 0
  %716 = vmatprep.subr.mxu0 %v32
  %717 = vmatpush1.msra.mxu0 %v31
  %718 = vmatprep.subr.mxu0 %v34
  %719 = vmatpush1.msra.mxu0 %v33
  %720 = vmatprep.subr.mxu0 %v36
  %721 = vmatpush1.msra.mxu0 %v35
  %722 = vmatprep.subr.mxu0 %v38
  %723 = vmatpush1.msra.mxu0 %v37
  %724 = vmatprep.subr.mxu0 0.0
  %725 = vmatpush1.msra.mxu0 0.0
  %726 = vmatprep.subr.mxu0 0.0
  %727 = vmatpush1.msra.mxu0 0.0
  %728 = vmatprep.subr.mxu0 0.0
  %729 = vmatpush1.msra.mxu0 0.0
  %730 = vmatprep.subr.mxu0 0.0
  %731 = vmatpush1.msra.mxu0 0.0
  %732 = vmatprep.subr.mxu0 0.0
  %733 = vmatpush1.msra.mxu0 0.0
  %734 = vmatprep.subr.mxu0 0.0
  %735 = vmatpush1.msra.mxu0 0.0
  %736 = vmatprep.subr.mxu0 0.0
  %737 = vmatpush1.msra.mxu0 0.0
  %738 = vmatprep.subr.mxu0 0.0
  %739 = vmatpush1.msra.mxu0 0.0
  %740 = vmatprep.subr.mxu0 0.0
  %741 = vmatpush1.msra.mxu0 0.0
  %742 = vmatprep.subr.mxu0 0.0
  %743 = vmatpush1.msra.mxu0 0.0
  %744 = vmatprep.subr.mxu0 0.0
  %745 = vmatpush1.msra.mxu0 0.0
  %746 = vmatprep.subr.mxu0 0.0
  %747 = vmatpush1.msra.mxu0 0.0
  %748 = vmatprep.subr.mxu0 0.0
  %749 = vmatpush1.msra.mxu0 0.0
  %750 = vmatprep.subr.mxu0 0.0
  %751 = vmatpush1.msra.mxu0 0.0
  %752 = vmatprep.subr.mxu0 0.0
  %753 = vmatpush1.msra.mxu0 0.0
  %754 = vmatprep.subr.mxu0 0.0
  %755 = vmatpush1.msra.mxu0 0.0
  %756 = vmatprep.subr.mxu0 0.0
  %757 = vmatpush1.msra.mxu0 0.0
  %758 = vmatprep.subr.mxu0 0.0
  %759 = vmatpush1.msra.mxu0 0.0
  %760 = vmatprep.subr.mxu0 0.0
  %761 = vmatpush1.msra.mxu0 0.0
  %762 = vmatprep.subr.mxu0 0.0
  %763 = vmatpush1.msra.mxu0 0.0
  %764 = vmatprep.subr.mxu0 0.0
  %765 = vmatpush1.msra.mxu0 0.0
  %766 = vmatprep.subr.mxu0 0.0
  %767 = vmatpush1.msra.mxu0 0.0
  %768 = vmatprep.subr.mxu0 0.0
  %769 = vmatpush1.msra.mxu0 0.0
  %770 = vmatprep.subr.mxu0 0.0
  %771 = vmatpush1.msra.mxu0 0.0
  %772 = vmatprep.subr.mxu0 0.0
  %773 = vmatpush1.msra.mxu0 0.0
  %774 = vmatprep.subr.mxu0 0.0
  %775 = vmatpush1.msra.mxu0 0.0
  %776 = vmatprep.subr.mxu0 0.0
  %777 = vmatpush1.msra.mxu0 0.0
  %778 = vmatprep.subr.mxu0 0.0
  %779 = vmatpush1.msra.mxu0 0.0
  %780 = vmatprep.mubr.f32.mxu0 0.0
  %781 = vmatmul.mubr.f32.gmra.mrb[0].mxu0 %v714
  %v782 = vpop.f32.mrb[0].mxu0
  %v783 = vadd.f32 0.0, %v782
  %v784 = vpop.f32.mrb[0].mxu0
  %v785 = vadd.f32 0.0, %v784
  %786 = vdwg.mxu0
  %v787 = vadd.f32 %v785, %v55
  %v788 = vadd.f32 %v783, %v48
  %v789 = vadd.f32 %v787, %v680
  %v790 = vxor.u32 %v789, 2147483648
  %v791 = vmul.f32 %v790, 1.442695
  %v792 = vpow.pop %v791
  %v793 = vadd.f32 %v792, 1.0
  %v794 = vrcp.pop %v793
  %v795 = vmul.f32 1.0, %v794
  %797 = vrot.lane.b32.xlu0 %v680, 64
  %v798 = vpop.permute.xlu0 %797
  %v800 = vmul.f32 %v795, %v798
  %802 = vrot.lane.b32.xlu0 %v800, 64
  %v803 = vpop.permute.xlu0 %802
  %v805 = vadd.f32 %v787, %v803
  %v806 = vtanh.pop %v805
  %v807 = vsub.f32 1.0, %v795
  %809 = vrot.lane.b32.xlu0 %v806, 96
  %v810 = vpop.permute.xlu0 %809
  %v812 = vmul.f32 %v807, %v810
  %v813 = vmul.f32 %v795, %v607
  %v814 = vadd.f32 %v812, %v813
  %816 = vrot.lane.b32.xlu0 %v814, 96
  %v817 = vpop.permute.xlu0 %816
  %v818 = vsel %vm93, %v817, 0
  %820 = vmatprep.subr.mxu0 0.0
  %821 = vmatpush1.msra.mxu0 %v39
  %822 = vmatprep.subr.mxu0 0.0
  %823 = vmatpush1.msra.mxu0 %v40
  %824 = vmatprep.subr.mxu0 0.0
  %825 = vmatpush1.msra.mxu0 %v41
  %826 = vmatprep.subr.mxu0 0.0
  %827 = vmatpush1.msra.mxu0 %v42
  %828 = vmatprep.subr.mxu0 0.0
  %829 = vmatpush1.msra.mxu0 0.0
  %830 = vmatprep.subr.mxu0 0.0
  %831 = vmatpush1.msra.mxu0 0.0
  %832 = vmatprep.subr.mxu0 0.0
  %833 = vmatpush1.msra.mxu0 0.0
  %834 = vmatprep.subr.mxu0 0.0
  %835 = vmatpush1.msra.mxu0 0.0
  %836 = vmatprep.subr.mxu0 0.0
  %837 = vmatpush1.msra.mxu0 0.0
  %838 = vmatprep.subr.mxu0 0.0
  %839 = vmatpush1.msra.mxu0 0.0
  %840 = vmatprep.subr.mxu0 0.0
  %841 = vmatpush1.msra.mxu0 0.0
  %842 = vmatprep.subr.mxu0 0.0
  %843 = vmatpush1.msra.mxu0 0.0
  %844 = vmatprep.subr.mxu0 0.0
  %845 = vmatpush1.msra.mxu0 0.0
  %846 = vmatprep.subr.mxu0 0.0
  %847 = vmatpush1.msra.mxu0 0.0
  %848 = vmatprep.subr.mxu0 0.0
  %849 = vmatpush1.msra.mxu0 0.0
  %850 = vmatprep.subr.mxu0 0.0
  %851 = vmatpush1.msra.mxu0 0.0
  %852 = vmatprep.subr.mxu0 0.0
  %853 = vmatpush1.msra.mxu0 0.0
  %854 = vmatprep.subr.mxu0 0.0
  %855 = vmatpush1.msra.mxu0 0.0
  %856 = vmatprep.subr.mxu0 0.0
  %857 = vmatpush1.msra.mxu0 0.0
  %858 = vmatprep.subr.mxu0 0.0
  %859 = vmatpush1.msra.mxu0 0.0
  %860 = vmatprep.subr.mxu0 0.0
  %861 = vmatpush1.msra.mxu0 0.0
  %862 = vmatprep.subr.mxu0 0.0
  %863 = vmatpush1.msra.mxu0 0.0
  %864 = vmatprep.subr.mxu0 0.0
  %865 = vmatpush1.msra.mxu0 0.0
  %866 = vmatprep.subr.mxu0 0.0
  %867 = vmatpush1.msra.mxu0 0.0
  %868 = vmatprep.subr.mxu0 0.0
  %869 = vmatpush1.msra.mxu0 0.0
  %870 = vmatprep.subr.mxu0 0.0
  %871 = vmatpush1.msra.mxu0 0.0
  %872 = vmatprep.subr.mxu0 0.0
  %873 = vmatpush1.msra.mxu0 0.0
  %874 = vmatprep.subr.mxu0 0.0
  %875 = vmatpush1.msra.mxu0 0.0
  %876 = vmatprep.subr.mxu0 0.0
  %877 = vmatpush1.msra.mxu0 0.0
  %878 = vmatprep.subr.mxu0 0.0
  %879 = vmatpush1.msra.mxu0 0.0
  %880 = vmatprep.subr.mxu0 0.0
  %881 = vmatpush1.msra.mxu0 0.0
  %882 = vmatprep.subr.mxu0 0.0
  %883 = vmatpush1.msra.mxu0 0.0
  %884 = vmatprep.mubr.f32.mxu0 0.0
  %885 = vmatmul.mubr.f32.gmra.mrb[0].mxu0 %v818
  %v886 = vpop.f32.mrb[0].mxu0
  %v887 = vadd.f32 %v62, %v886
  %v888 = vpop.f32.mrb[0].mxu0
  %889 = vdwg.mxu0
  %s890 = scalar_lea.vmem %s0, 8
  %v891 = vld [vmem:[%s890] sm:$0x3]
  %v892 = vadd.f32 %v891, %v788
  %v893 = vxor.u32 %v892, 2147483648
  %v894 = vmul.f32 %v893, 1.442695
  %v895 = vpow.pop %v894
  %v896 = vadd.f32 %v895, 1.0
  %v897 = vrcp.pop %v896
  %v898 = vmul.f32 1.0, %v897
  %900 = vrot.lane.b32.xlu0 %v788, 64
  %v901 = vpop.permute.xlu0 %900
  %v903 = vmul.f32 %v898, %v901
  %905 = vrot.lane.b32.xlu0 %v903, 64
  %v906 = vpop.permute.xlu0 %905
  %v908 = vadd.f32 %v891, %v906
  %v909 = vtanh.pop %v908
  %v910 = vsub.f32 1.0, %v898
  %912 = vrot.lane.b32.xlu0 %v909, 96
  %v913 = vpop.permute.xlu0 %912
  %v915 = vmul.f32 %v910, %v913
  %v916 = vmul.f32 %v898, %v710
  %v917 = vadd.f32 %v915, %v916
  %919 = vrot.lane.b32.xlu0 %v917, 96
  %v920 = vpop.permute.xlu0 %919
  %v921 = vsel %vm93, %v920, 0
  %923 = vmatprep.subr.mxu0 %v32
  %924 = vmatpush1.msra.mxu0 %v31
  %925 = vmatprep.subr.mxu0 %v34
  %926 = vmatpush1.msra.mxu0 %v33
  %927 = vmatprep.subr.mxu0 %v36
  %928 = vmatpush1.msra.mxu0 %v35
  %929 = vmatprep.subr.mxu0 %v38
  %930 = vmatpush1.msra.mxu0 %v37
  %931 = vmatprep.subr.mxu0 0.0
  %932 = vmatpush1.msra.mxu0 0.0
  %933 = vmatprep.subr.mxu0 0.0
  %934 = vmatpush1.msra.mxu0 0.0
  %935 = vmatprep.subr.mxu0 0.0
  %936 = vmatpush1.msra.mxu0 0.0
  %937 = vmatprep.subr.mxu0 0.0
  %938 = vmatpush1.msra.mxu0 0.0
  %939 = vmatprep.subr.mxu0 0.0
  %940 = vmatpush1.msra.mxu0 0.0
  %941 = vmatprep.subr.mxu0 0.0
  %942 = vmatpush1.msra.mxu0 0.0
  %943 = vmatprep.subr.mxu0 0.0
  %944 = vmatpush1.msra.mxu0 0.0
  %945 = vmatprep.subr.mxu0 0.0
  %946 = vmatpush1.msra.mxu0 0.0
  %947 = vmatprep.subr.mxu0 0.0
  %948 = vmatpush1.msra.mxu0 0.0
  %949 = vmatprep.subr.mxu0 0.0
  %950 = vmatpush1.msra.mxu0 0.0
  %951 = vmatprep.subr.mxu0 0.0
  %952 = vmatpush1.msra.mxu0 0.0
  %953 = vmatprep.subr.mxu0 0.0
  %954 = vmatpush1.msra.mxu0 0.0
  %955 = vmatprep.subr.mxu0 0.0
  %956 = vmatpush1.msra.mxu0 0.0
  %957 = vmatprep.subr.mxu0 0.0
  %958 = vmatpush1.msra.mxu0 0.0
  %959 = vmatprep.subr.mxu0 0.0
  %960 = vmatpush1.msra.mxu0 0.0
  %961 = vmatprep.subr.mxu0 0.0
  %962 = vmatpush1.msra.mxu0 0.0
  %963 = vmatprep.subr.mxu0 0.0
  %964 = vmatpush1.msra.mxu0 0.0
  %965 = vmatprep.subr.mxu0 0.0
  %966 = vmatpush1.msra.mxu0 0.0
  %967 = vmatprep.subr.mxu0 0.0
  %968 = vmatpush1.msra.mxu0 0.0
  %969 = vmatprep.subr.mxu0 0.0
  %970 = vmatpush1.msra.mxu0 0.0
  %971 = vmatprep.subr.mxu0 0.0
  %972 = vmatpush1.msra.mxu0 0.0
  %973 = vmatprep.subr.mxu0 0.0
  %974 = vmatpush1.msra.mxu0 0.0
  %975 = vmatprep.subr.mxu0 0.0
  %976 = vmatpush1.msra.mxu0 0.0
  %977 = vmatprep.subr.mxu0 0.0
  %978 = vmatpush1.msra.mxu0 0.0
  %979 = vmatprep.subr.mxu0 0.0
  %980 = vmatpush1.msra.mxu0 0.0
  %981 = vmatprep.subr.mxu0 0.0
  %982 = vmatpush1.msra.mxu0 0.0
  %983 = vmatprep.subr.mxu0 0.0
  %984 = vmatpush1.msra.mxu0 0.0
  %985 = vmatprep.subr.mxu0 0.0
  %986 = vmatpush1.msra.mxu0 0.0
  %987 = vmatprep.mubr.f32.mxu0 0.0
  %988 = vmatmul.mubr.f32.gmra.mrb[0].mxu0 %v921
  %v989 = vpop.f32.mrb[0].mxu0
  %v990 = vadd.f32 0.0, %v989
  %v991 = vpop.f32.mrb[0].mxu0
  %v992 = vadd.f32 0.0, %v991
  %993 = vdwg.mxu0
  %v994 = vadd.f32 %v992, %v55
  %v995 = vadd.f32 %v990, %v48
  %v996 = vadd.f32 %v994, %v887
  %v997 = vxor.u32 %v996, 2147483648
  %v998 = vmul.f32 %v997, 1.442695
  %v999 = vpow.pop %v998
  %v1000 = vadd.f32 %v999, 1.0
  %v1001 = vrcp.pop %v1000
  %v1002 = vmul.f32 1.0, %v1001
  %1004 = vrot.lane.b32.xlu0 %v887, 64
  %v1005 = vpop.permute.xlu0 %1004
  %v1007 = vmul.f32 %v1002, %v1005
  %1009 = vrot.lane.b32.xlu0 %v1007, 64
  %v1010 = vpop.permute.xlu0 %1009
  %v1012 = vadd.f32 %v994, %v1010
  %v1013 = vtanh.pop %v1012
  %v1014 = vsub.f32 1.0, %v1002
  %1016 = vrot.lane.b32.xlu0 %v1013, 96
  %v1017 = vpop.permute.xlu0 %1016
  %v1019 = vmul.f32 %v1014, %v1017
  %v1020 = vmul.f32 %v1002, %v814
  %v1021 = vadd.f32 %v1019, %v1020
  %1023 = vrot.lane.b32.xlu0 %v1021, 96
  %v1024 = vpop.permute.xlu0 %1023
  %v1025 = vsel %vm93, %v1024, 0
  %1027 = vmatprep.subr.mxu0 0.0
  %1028 = vmatpush1.msra.mxu0 %v39
  %1029 = vmatprep.subr.mxu0 0.0
  %1030 = vmatpush1.msra.mxu0 %v40
  %1031 = vmatprep.subr.mxu0 0.0
  %1032 = vmatpush1.msra.mxu0 %v41
  %1033 = vmatprep.subr.mxu0 0.0
  %1034 = vmatpush1.msra.mxu0 %v42
  %1035 = vmatprep.subr.mxu0 0.0
  %1036 = vmatpush1.msra.mxu0 0.0
  %1037 = vmatprep.subr.mxu0 0.0
  %1038 = vmatpush1.msra.mxu0 0.0
  %1039 = vmatprep.subr.mxu0 0.0
  %1040 = vmatpush1.msra.mxu0 0.0
  %1041 = vmatprep.subr.mxu0 0.0
  %1042 = vmatpush1.msra.mxu0 0.0
  %1043 = vmatprep.subr.mxu0 0.0
  %1044 = vmatpush1.msra.mxu0 0.0
  %1045 = vmatprep.subr.mxu0 0.0
  %1046 = vmatpush1.msra.mxu0 0.0
  %1047 = vmatprep.subr.mxu0 0.0
  %1048 = vmatpush1.msra.mxu0 0.0
  %1049 = vmatprep.subr.mxu0 0.0
  %1050 = vmatpush1.msra.mxu0 0.0
  %1051 = vmatprep.subr.mxu0 0.0
  %1052 = vmatpush1.msra.mxu0 0.0
  %1053 = vmatprep.subr.mxu0 0.0
  %1054 = vmatpush1.msra.mxu0 0.0
  %1055 = vmatprep.subr.mxu0 0.0
  %1056 = vmatpush1.msra.mxu0 0.0
  %1057 = vmatprep.subr.mxu0 0.0
  %1058 = vmatpush1.msra.mxu0 0.0
  %1059 = vmatprep.subr.mxu0 0.0
  %1060 = vmatpush1.msra.mxu0 0.0
  %1061 = vmatprep.subr.mxu0 0.0
  %1062 = vmatpush1.msra.mxu0 0.0
  %1063 = vmatprep.subr.mxu0 0.0
  %1064 = vmatpush1.msra.mxu0 0.0
  %1065 = vmatprep.subr.mxu0 0.0
  %1066 = vmatpush1.msra.mxu0 0.0
  %1067 = vmatprep.subr.mxu0 0.0
  %1068 = vmatpush1.msra.mxu0 0.0
  %1069 = vmatprep.subr.mxu0 0.0
  %1070 = vmatpush1.msra.mxu0 0.0
  %1071 = vmatprep.subr.mxu0 0.0
  %1072 = vmatpush1.msra.mxu0 0.0
  %1073 = vmatprep.subr.mxu0 0.0
  %1074 = vmatpush1.msra.mxu0 0.0
  %1075 = vmatprep.subr.mxu0 0.0
  %1076 = vmatpush1.msra.mxu0 0.0
  %1077 = vmatprep.subr.mxu0 0.0
  %1078 = vmatpush1.msra.mxu0 0.0
  %1079 = vmatprep.subr.mxu0 0.0
  %1080 = vmatpush1.msra.mxu0 0.0
  %1081 = vmatprep.subr.mxu0 0.0
  %1082 = vmatpush1.msra.mxu0 0.0
  %1083 = vmatprep.subr.mxu0 0.0
  %1084 = vmatpush1.msra.mxu0 0.0
  %1085 = vmatprep.subr.mxu0 0.0
  %1086 = vmatpush1.msra.mxu0 0.0
  %1087 = vmatprep.subr.mxu0 0.0
  %1088 = vmatpush1.msra.mxu0 0.0
  %1089 = vmatprep.subr.mxu0 0.0
  %1090 = vmatpush1.msra.mxu0 0.0
  %1091 = vmatprep.mubr.f32.mxu0 0.0
  %1092 = vmatmul.mubr.f32.gmra.mrb[0].mxu0 %v1025
  %v1093 = vpop.f32.mrb[0].mxu0
  %v1094 = vadd.f32 %v62, %v1093
  %v1095 = vpop.f32.mrb[0].mxu0
  %1096 = vdwg.mxu0
  %s1097 = scalar_lea.vmem %s0, 10
  %v1098 = vld [vmem:[%s1097] sm:$0x3]
  %v1099 = vadd.f32 %v1098, %v995
  %v1100 = vxor.u32 %v1099, 2147483648
  %v1101 = vmul.f32 %v1100, 1.442695
  %v1102 = vpow.pop %v1101
  %v1103 = vadd.f32 %v1102, 1.0
  %v1104 = vrcp.pop %v1103
  %v1105 = vmul.f32 1.0, %v1104
  %1107 = vrot.lane.b32.xlu0 %v995, 64
  %v1108 = vpop.permute.xlu0 %1107
  %v1110 = vmul.f32 %v1105, %v1108
  %1112 = vrot.lane.b32.xlu0 %v1110, 64
  %v1113 = vpop.permute.xlu0 %1112
  %v1115 = vadd.f32 %v1098, %v1113
  %v1116 = vtanh.pop %v1115
  %v1117 = vsub.f32 1.0, %v1105
  %1119 = vrot.lane.b32.xlu0 %v1116, 96
  %v1120 = vpop.permute.xlu0 %1119
  %v1122 = vmul.f32 %v1117, %v1120
  %v1123 = vmul.f32 %v1105, %v917
  %v1124 = vadd.f32 %v1122, %v1123
  %1126 = vrot.lane.b32.xlu0 %v1124, 96
  %v1127 = vpop.permute.xlu0 %1126
  %v1128 = vsel %vm93, %v1127, 0
  %1130 = vmatprep.subr.mxu0 %v32
  %1131 = vmatpush1.msra.mxu0 %v31
  %1132 = vmatprep.subr.mxu0 %v34
  %1133 = vmatpush1.msra.mxu0 %v33
  %1134 = vmatprep.subr.mxu0 %v36
  %1135 = vmatpush1.msra.mxu0 %v35
  %1136 = vmatprep.subr.mxu0 %v38
  %1137 = vmatpush1.msra.mxu0 %v37
  %1138 = vmatprep.subr.mxu0 0.0
  %1139 = vmatpush1.msra.mxu0 0.0
  %1140 = vmatprep.subr.mxu0 0.0
  %1141 = vmatpush1.msra.mxu0 0.0
  %1142 = vmatprep.subr.mxu0 0.0
  %1143 = vmatpush1.msra.mxu0 0.0
  %1144 = vmatprep.subr.mxu0 0.0
  %1145 = vmatpush1.msra.mxu0 0.0
  %1146 = vmatprep.subr.mxu0 0.0
  %1147 = vmatpush1.msra.mxu0 0.0
  %1148 = vmatprep.subr.mxu0 0.0
  %1149 = vmatpush1.msra.mxu0 0.0
  %1150 = vmatprep.subr.mxu0 0.0
  %1151 = vmatpush1.msra.mxu0 0.0
  %1152 = vmatprep.subr.mxu0 0.0
  %1153 = vmatpush1.msra.mxu0 0.0
  %1154 = vmatprep.subr.mxu0 0.0
  %1155 = vmatpush1.msra.mxu0 0.0
  %1156 = vmatprep.subr.mxu0 0.0
  %1157 = vmatpush1.msra.mxu0 0.0
  %1158 = vmatprep.subr.mxu0 0.0
  %1159 = vmatpush1.msra.mxu0 0.0
  %1160 = vmatprep.subr.mxu0 0.0
  %1161 = vmatpush1.msra.mxu0 0.0
  %1162 = vmatprep.subr.mxu0 0.0
  %1163 = vmatpush1.msra.mxu0 0.0
  %1164 = vmatprep.subr.mxu0 0.0
  %1165 = vmatpush1.msra.mxu0 0.0
  %1166 = vmatprep.subr.mxu0 0.0
  %1167 = vmatpush1.msra.mxu0 0.0
  %1168 = vmatprep.subr.mxu0 0.0
  %1169 = vmatpush1.msra.mxu0 0.0
  %1170 = vmatprep.subr.mxu0 0.0
  %1171 = vmatpush1.msra.mxu0 0.0
  %1172 = vmatprep.subr.mxu0 0.0
  %1173 = vmatpush1.msra.mxu0 0.0
  %1174 = vmatprep.subr.mxu0 0.0
  %1175 = vmatpush1.msra.mxu0 0.0
  %1176 = vmatprep.subr.mxu0 0.0
  %1177 = vmatpush1.msra.mxu0 0.0
  %1178 = vmatprep.subr.mxu0 0.0
  %1179 = vmatpush1.msra.mxu0 0.0
  %1180 = vmatprep.subr.mxu0 0.0
  %1181 = vmatpush1.msra.mxu0 0.0
  %1182 = vmatprep.subr.mxu0 0.0
  %1183 = vmatpush1.msra.mxu0 0.0
  %1184 = vmatprep.subr.mxu0 0.0
  %1185 = vmatpush1.msra.mxu0 0.0
  %1186 = vmatprep.subr.mxu0 0.0
  %1187 = vmatpush1.msra.mxu0 0.0
  %1188 = vmatprep.subr.mxu0 0.0
  %1189 = vmatpush1.msra.mxu0 0.0
  %1190 = vmatprep.subr.mxu0 0.0
  %1191 = vmatpush1.msra.mxu0 0.0
  %1192 = vmatprep.subr.mxu0 0.0
  %1193 = vmatpush1.msra.mxu0 0.0
  %1194 = vmatprep.mubr.f32.mxu0 0.0
  %1195 = vmatmul.mubr.f32.gmra.mrb[0].mxu0 %v1128
  %v1196 = vpop.f32.mrb[0].mxu0
  %v1197 = vadd.f32 0.0, %v1196
  %v1198 = vpop.f32.mrb[0].mxu0
  %v1199 = vadd.f32 0.0, %v1198
  %1200 = vdwg.mxu0
  %v1201 = vadd.f32 %v1199, %v55
  %v1202 = vadd.f32 %v1197, %v48
  %v1203 = vadd.f32 %v1201, %v1094
  %v1204 = vxor.u32 %v1203, 2147483648
  %v1205 = vmul.f32 %v1204, 1.442695
  %v1206 = vpow.pop %v1205
  %v1207 = vadd.f32 %v1206, 1.0
  %v1208 = vrcp.pop %v1207
  %v1209 = vmul.f32 1.0, %v1208
  %1211 = vrot.lane.b32.xlu0 %v1094, 64
  %v1212 = vpop.permute.xlu0 %1211
  %v1214 = vmul.f32 %v1209, %v1212
  %1216 = vrot.lane.b32.xlu0 %v1214, 64
  %v1217 = vpop.permute.xlu0 %1216
  %v1219 = vadd.f32 %v1201, %v1217
  %v1220 = vtanh.pop %v1219
  %v1221 = vsub.f32 1.0, %v1209
  %1223 = vrot.lane.b32.xlu0 %v1220, 96
  %v1224 = vpop.permute.xlu0 %1223
  %v1226 = vmul.f32 %v1221, %v1224
  %v1227 = vmul.f32 %v1209, %v1021
  %v1228 = vadd.f32 %v1226, %v1227
  %1230 = vrot.lane.b32.xlu0 %v1228, 96
  %v1231 = vpop.permute.xlu0 %1230
  %v1232 = vsel %vm93, %v1231, 0
  %1234 = vmatprep.subr.mxu0 0.0
  %1235 = vmatpush1.msra.mxu0 %v39
  %1236 = vmatprep.subr.mxu0 0.0
  %1237 = vmatpush1.msra.mxu0 %v40
  %1238 = vmatprep.subr.mxu0 0.0
  %1239 = vmatpush1.msra.mxu0 %v41
  %1240 = vmatprep.subr.mxu0 0.0
  %1241 = vmatpush1.msra.mxu0 %v42
  %1242 = vmatprep.subr.mxu0 0.0
  %1243 = vmatpush1.msra.mxu0 0.0
  %1244 = vmatprep.subr.mxu0 0.0
  %1245 = vmatpush1.msra.mxu0 0.0
  %1246 = vmatprep.subr.mxu0 0.0
  %1247 = vmatpush1.msra.mxu0 0.0
  %1248 = vmatprep.subr.mxu0 0.0
  %1249 = vmatpush1.msra.mxu0 0.0
  %1250 = vmatprep.subr.mxu0 0.0
  %1251 = vmatpush1.msra.mxu0 0.0
  %1252 = vmatprep.subr.mxu0 0.0
  %1253 = vmatpush1.msra.mxu0 0.0
  %1254 = vmatprep.subr.mxu0 0.0
  %1255 = vmatpush1.msra.mxu0 0.0
  %1256 = vmatprep.subr.mxu0 0.0
  %1257 = vmatpush1.msra.mxu0 0.0
  %1258 = vmatprep.subr.mxu0 0.0
  %1259 = vmatpush1.msra.mxu0 0.0
  %1260 = vmatprep.subr.mxu0 0.0
  %1261 = vmatpush1.msra.mxu0 0.0
  %1262 = vmatprep.subr.mxu0 0.0
  %1263 = vmatpush1.msra.mxu0 0.0
  %1264 = vmatprep.subr.mxu0 0.0
  %1265 = vmatpush1.msra.mxu0 0.0
  %1266 = vmatprep.subr.mxu0 0.0
  %1267 = vmatpush1.msra.mxu0 0.0
  %1268 = vmatprep.subr.mxu0 0.0
  %1269 = vmatpush1.msra.mxu0 0.0
  %1270 = vmatprep.subr.mxu0 0.0
  %1271 = vmatpush1.msra.mxu0 0.0
  %1272 = vmatprep.subr.mxu0 0.0
  %1273 = vmatpush1.msra.mxu0 0.0
  %1274 = vmatprep.subr.mxu0 0.0
  %1275 = vmatpush1.msra.mxu0 0.0
  %1276 = vmatprep.subr.mxu0 0.0
  %1277 = vmatpush1.msra.mxu0 0.0
  %1278 = vmatprep.subr.mxu0 0.0
  %1279 = vmatpush1.msra.mxu0 0.0
  %1280 = vmatprep.subr.mxu0 0.0
  %1281 = vmatpush1.msra.mxu0 0.0
  %1282 = vmatprep.subr.mxu0 0.0
  %1283 = vmatpush1.msra.mxu0 0.0
  %1284 = vmatprep.subr.mxu0 0.0
  %1285 = vmatpush1.msra.mxu0 0.0
  %1286 = vmatprep.subr.mxu0 0.0
  %1287 = vmatpush1.msra.mxu0 0.0
  %1288 = vmatprep.subr.mxu0 0.0
  %1289 = vmatpush1.msra.mxu0 0.0
  %1290 = vmatprep.subr.mxu0 0.0
  %1291 = vmatpush1.msra.mxu0 0.0
  %1292 = vmatprep.subr.mxu0 0.0
  %1293 = vmatpush1.msra.mxu0 0.0
  %1294 = vmatprep.subr.mxu0 0.0
  %1295 = vmatpush1.msra.mxu0 0.0
  %1296 = vmatprep.subr.mxu0 0.0
  %1297 = vmatpush1.msra.mxu0 0.0
  %1298 = vmatprep.mubr.f32.mxu0 0.0
  %1299 = vmatmul.mubr.f32.gmra.mrb[0].mxu0 %v1232
  %v1300 = vpop.f32.mrb[0].mxu0
  %v1301 = vadd.f32 %v62, %v1300
  %v1302 = vpop.f32.mrb[0].mxu0
  %1303 = vdwg.mxu0
  %s1304 = scalar_lea.vmem %s0, 12
  %v1305 = vld [vmem:[%s1304] sm:$0x3]
  %v1306 = vadd.f32 %v1305, %v1202
  %v1307 = vxor.u32 %v1306, 2147483648
  %v1308 = vmul.f32 %v1307, 1.442695
  %v1309 = vpow.pop %v1308
  %v1310 = vadd.f32 %v1309, 1.0
  %v1311 = vrcp.pop %v1310
  %v1312 = vmul.f32 1.0, %v1311
  %1314 = vrot.lane.b32.xlu0 %v1202, 64
  %v1315 = vpop.permute.xlu0 %1314
  %v1317 = vmul.f32 %v1312, %v1315
  %1319 = vrot.lane.b32.xlu0 %v1317, 64
  %v1320 = vpop.permute.xlu0 %1319
  %v1322 = vadd.f32 %v1305, %v1320
  %v1323 = vtanh.pop %v1322
  %v1324 = vsub.f32 1.0, %v1312
  %1326 = vrot.lane.b32.xlu0 %v1323, 96
  %v1327 = vpop.permute.xlu0 %1326
  %v1329 = vmul.f32 %v1324, %v1327
  %v1330 = vmul.f32 %v1312, %v1124
  %v1331 = vadd.f32 %v1329, %v1330
  %1333 = vrot.lane.b32.xlu0 %v1331, 96
  %v1334 = vpop.permute.xlu0 %1333
  %v1335 = vsel %vm93, %v1334, 0
  %1337 = vmatprep.subr.mxu0 %v32
  %1338 = vmatpush1.msra.mxu0 %v31
  %1339 = vmatprep.subr.mxu0 %v34
  %1340 = vmatpush1.msra.mxu0 %v33
  %1341 = vmatprep.subr.mxu0 %v36
  %1342 = vmatpush1.msra.mxu0 %v35
  %1343 = vmatprep.subr.mxu0 %v38
  %1344 = vmatpush1.msra.mxu0 %v37
  %1345 = vmatprep.subr.mxu0 0.0
  %1346 = vmatpush1.msra.mxu0 0.0
  %1347 = vmatprep.subr.mxu0 0.0
  %1348 = vmatpush1.msra.mxu0 0.0
  %1349 = vmatprep.subr.mxu0 0.0
  %1350 = vmatpush1.msra.mxu0 0.0
  %1351 = vmatprep.subr.mxu0 0.0
  %1352 = vmatpush1.msra.mxu0 0.0
  %1353 = vmatprep.subr.mxu0 0.0
  %1354 = vmatpush1.msra.mxu0 0.0
  %1355 = vmatprep.subr.mxu0 0.0
  %1356 = vmatpush1.msra.mxu0 0.0
  %1357 = vmatprep.subr.mxu0 0.0
  %1358 = vmatpush1.msra.mxu0 0.0
  %1359 = vmatprep.subr.mxu0 0.0
  %1360 = vmatpush1.msra.mxu0 0.0
  %1361 = vmatprep.subr.mxu0 0.0
  %1362 = vmatpush1.msra.mxu0 0.0
  %1363 = vmatprep.subr.mxu0 0.0
  %1364 = vmatpush1.msra.mxu0 0.0
  %1365 = vmatprep.subr.mxu0 0.0
  %1366 = vmatpush1.msra.mxu0 0.0
  %1367 = vmatprep.subr.mxu0 0.0
  %1368 = vmatpush1.msra.mxu0 0.0
  %1369 = vmatprep.subr.mxu0 0.0
  %1370 = vmatpush1.msra.mxu0 0.0
  %1371 = vmatprep.subr.mxu0 0.0
  %1372 = vmatpush1.msra.mxu0 0.0
  %1373 = vmatprep.subr.mxu0 0.0
  %1374 = vmatpush1.msra.mxu0 0.0
  %1375 = vmatprep.subr.mxu0 0.0
  %1376 = vmatpush1.msra.mxu0 0.0
  %1377 = vmatprep.subr.mxu0 0.0
  %1378 = vmatpush1.msra.mxu0 0.0
  %1379 = vmatprep.subr.mxu0 0.0
  %1380 = vmatpush1.msra.mxu0 0.0
  %1381 = vmatprep.subr.mxu0 0.0
  %1382 = vmatpush1.msra.mxu0 0.0
  %1383 = vmatprep.subr.mxu0 0.0
  %1384 = vmatpush1.msra.mxu0 0.0
  %1385 = vmatprep.subr.mxu0 0.0
  %1386 = vmatpush1.msra.mxu0 0.0
  %1387 = vmatprep.subr.mxu0 0.0
  %1388 = vmatpush1.msra.mxu0 0.0
  %1389 = vmatprep.subr.mxu0 0.0
  %1390 = vmatpush1.msra.mxu0 0.0
  %1391 = vmatprep.subr.mxu0 0.0
  %1392 = vmatpush1.msra.mxu0 0.0
  %1393 = vmatprep.subr.mxu0 0.0
  %1394 = vmatpush1.msra.mxu0 0.0
  %1395 = vmatprep.subr.mxu0 0.0
  %1396 = vmatpush1.msra.mxu0 0.0
  %1397 = vmatprep.subr.mxu0 0.0
  %1398 = vmatpush1.msra.mxu0 0.0
  %1399 = vmatprep.subr.mxu0 0.0
  %1400 = vmatpush1.msra.mxu0 0.0
  %1401 = vmatprep.mubr.f32.mxu0 0.0
  %1402 = vmatmul.mubr.f32.gmra.mrb[0].mxu0 %v1335
  %v1403 = vpop.f32.mrb[0].mxu0
  %v1404 = vadd.f32 0.0, %v1403
  %v1405 = vpop.f32.mrb[0].mxu0
  %v1406 = vadd.f32 0.0, %v1405
  %1407 = vdwg.mxu0
  %v1408 = vadd.f32 %v1406, %v55
  %v1409 = vadd.f32 %v1404, %v48
  %v1410 = vadd.f32 %v1408, %v1301
  %v1411 = vxor.u32 %v1410, 2147483648
  %v1412 = vmul.f32 %v1411, 1.442695
  %v1413 = vpow.pop %v1412
  %v1414 = vadd.f32 %v1413, 1.0
  %v1415 = vrcp.pop %v1414
  %v1416 = vmul.f32 1.0, %v1415
  %1418 = vrot.lane.b32.xlu0 %v1301, 64
  %v1419 = vpop.permute.xlu0 %1418
  %v1421 = vmul.f32 %v1416, %v1419
  %1423 = vrot.lane.b32.xlu0 %v1421, 64
  %v1424 = vpop.permute.xlu0 %1423
  %v1426 = vadd.f32 %v1408, %v1424
  %v1427 = vtanh.pop %v1426
  %v1428 = vsub.f32 1.0, %v1416
  %1430 = vrot.lane.b32.xlu0 %v1427, 96
  %v1431 = vpop.permute.xlu0 %1430
  %v1433 = vmul.f32 %v1428, %v1431
  %v1434 = vmul.f32 %v1416, %v1228
  %v1435 = vadd.f32 %v1433, %v1434
  %1437 = vrot.lane.b32.xlu0 %v1435, 96
  %v1438 = vpop.permute.xlu0 %1437
  %v1439 = vsel %vm93, %v1438, 0
  %1441 = vmatprep.subr.mxu0 0.0
  %1442 = vmatpush1.msra.mxu0 %v39
  %1443 = vmatprep.subr.mxu0 0.0
  %1444 = vmatpush1.msra.mxu0 %v40
  %1445 = vmatprep.subr.mxu0 0.0
  %1446 = vmatpush1.msra.mxu0 %v41
  %1447 = vmatprep.subr.mxu0 0.0
  %1448 = vmatpush1.msra.mxu0 %v42
  %1449 = vmatprep.subr.mxu0 0.0
  %1450 = vmatpush1.msra.mxu0 0.0
  %1451 = vmatprep.subr.mxu0 0.0
  %1452 = vmatpush1.msra.mxu0 0.0
  %1453 = vmatprep.subr.mxu0 0.0
  %1454 = vmatpush1.msra.mxu0 0.0
  %1455 = vmatprep.subr.mxu0 0.0
  %1456 = vmatpush1.msra.mxu0 0.0
  %1457 = vmatprep.subr.mxu0 0.0
  %1458 = vmatpush1.msra.mxu0 0.0
  %1459 = vmatprep.subr.mxu0 0.0
  %1460 = vmatpush1.msra.mxu0 0.0
  %1461 = vmatprep.subr.mxu0 0.0
  %1462 = vmatpush1.msra.mxu0 0.0
  %1463 = vmatprep.subr.mxu0 0.0
  %1464 = vmatpush1.msra.mxu0 0.0
  %1465 = vmatprep.subr.mxu0 0.0
  %1466 = vmatpush1.msra.mxu0 0.0
  %1467 = vmatprep.subr.mxu0 0.0
  %1468 = vmatpush1.msra.mxu0 0.0
  %1469 = vmatprep.subr.mxu0 0.0
  %1470 = vmatpush1.msra.mxu0 0.0
  %1471 = vmatprep.subr.mxu0 0.0
  %1472 = vmatpush1.msra.mxu0 0.0
  %1473 = vmatprep.subr.mxu0 0.0
  %1474 = vmatpush1.msra.mxu0 0.0
  %1475 = vmatprep.subr.mxu0 0.0
  %1476 = vmatpush1.msra.mxu0 0.0
  %1477 = vmatprep.subr.mxu0 0.0
  %1478 = vmatpush1.msra.mxu0 0.0
  %1479 = vmatprep.subr.mxu0 0.0
  %1480 = vmatpush1.msra.mxu0 0.0
  %1481 = vmatprep.subr.mxu0 0.0
  %1482 = vmatpush1.msra.mxu0 0.0
  %1483 = vmatprep.subr.mxu0 0.0
  %1484 = vmatpush1.msra.mxu0 0.0
  %1485 = vmatprep.subr.mxu0 0.0
  %1486 = vmatpush1.msra.mxu0 0.0
  %1487 = vmatprep.subr.mxu0 0.0
  %1488 = vmatpush1.msra.mxu0 0.0
  %1489 = vmatprep.subr.mxu0 0.0
  %1490 = vmatpush1.msra.mxu0 0.0
  %1491 = vmatprep.subr.mxu0 0.0
  %1492 = vmatpush1.msra.mxu0 0.0
  %1493 = vmatprep.subr.mxu0 0.0
  %1494 = vmatpush1.msra.mxu0 0.0
  %1495 = vmatprep.subr.mxu0 0.0
  %1496 = vmatpush1.msra.mxu0 0.0
  %1497 = vmatprep.subr.mxu0 0.0
  %1498 = vmatpush1.msra.mxu0 0.0
  %1499 = vmatprep.subr.mxu0 0.0
  %1500 = vmatpush1.msra.mxu0 0.0
  %1501 = vmatprep.subr.mxu0 0.0
  %1502 = vmatpush1.msra.mxu0 0.0
  %1503 = vmatprep.subr.mxu0 0.0
  %1504 = vmatpush1.msra.mxu0 0.0
  %1505 = vmatprep.mubr.f32.mxu0 0.0
  %1506 = vmatmul.mubr.f32.gmra.mrb[0].mxu0 %v1439
  %v1507 = vpop.f32.mrb[0].mxu0
  %v1508 = vadd.f32 %v62, %v1507
  %v1509 = vpop.f32.mrb[0].mxu0
  %1510 = vdwg.mxu0
  %s1511 = scalar_lea.vmem %s0, 14
  %v1512 = vld [vmem:[%s1511] sm:$0x3]
  %v1513 = vadd.f32 %v1512, %v1409
  %v1514 = vxor.u32 %v1513, 2147483648
  %v1515 = vmul.f32 %v1514, 1.442695
  %v1516 = vpow.pop %v1515
  %v1517 = vadd.f32 %v1516, 1.0
  %v1518 = vrcp.pop %v1517
  %v1519 = vmul.f32 1.0, %v1518
  %1521 = vrot.lane.b32.xlu0 %v1409, 64
  %v1522 = vpop.permute.xlu0 %1521
  %v1524 = vmul.f32 %v1519, %v1522
  %1526 = vrot.lane.b32.xlu0 %v1524, 64
  %v1527 = vpop.permute.xlu0 %1526
  %v1529 = vadd.f32 %v1512, %v1527
  %v1530 = vtanh.pop %v1529
  %v1531 = vsub.f32 1.0, %v1519
  %1533 = vrot.lane.b32.xlu0 %v1530, 96
  %v1534 = vpop.permute.xlu0 %1533
  %v1536 = vmul.f32 %v1531, %v1534
  %v1537 = vmul.f32 %v1519, %v1331
  %v1538 = vadd.f32 %v1536, %v1537
  %1540 = vrot.lane.b32.xlu0 %v1538, 96
  %v1541 = vpop.permute.xlu0 %1540
  %v1542 = vsel %vm93, %v1541, 0
  %1544 = vmatprep.subr.mxu0 %v32
  %1545 = vmatpush1.msra.mxu0 %v31
  %1546 = vmatprep.subr.mxu0 %v34
  %1547 = vmatpush1.msra.mxu0 %v33
  %1548 = vmatprep.subr.mxu0 %v36
  %1549 = vmatpush1.msra.mxu0 %v35
  %1550 = vmatprep.subr.mxu0 %v38
  %1551 = vmatpush1.msra.mxu0 %v37
  %1552 = vmatprep.subr.mxu0 0.0
  %1553 = vmatpush1.msra.mxu0 0.0
  %1554 = vmatprep.subr.mxu0 0.0
  %1555 = vmatpush1.msra.mxu0 0.0
  %1556 = vmatprep.subr.mxu0 0.0
  %1557 = vmatpush1.msra.mxu0 0.0
  %1558 = vmatprep.subr.mxu0 0.0
  %1559 = vmatpush1.msra.mxu0 0.0
  %1560 = vmatprep.subr.mxu0 0.0
  %1561 = vmatpush1.msra.mxu0 0.0
  %1562 = vmatprep.subr.mxu0 0.0
  %1563 = vmatpush1.msra.mxu0 0.0
  %1564 = vmatprep.subr.mxu0 0.0
  %1565 = vmatpush1.msra.mxu0 0.0
  %1566 = vmatprep.subr.mxu0 0.0
  %1567 = vmatpush1.msra.mxu0 0.0
  %1568 = vmatprep.subr.mxu0 0.0
  %1569 = vmatpush1.msra.mxu0 0.0
  %1570 = vmatprep.subr.mxu0 0.0
  %1571 = vmatpush1.msra.mxu0 0.0
  %1572 = vmatprep.subr.mxu0 0.0
  %1573 = vmatpush1.msra.mxu0 0.0
  %1574 = vmatprep.subr.mxu0 0.0
  %1575 = vmatpush1.msra.mxu0 0.0
  %1576 = vmatprep.subr.mxu0 0.0
  %1577 = vmatpush1.msra.mxu0 0.0
  %1578 = vmatprep.subr.mxu0 0.0
  %1579 = vmatpush1.msra.mxu0 0.0
  %1580 = vmatprep.subr.mxu0 0.0
  %1581 = vmatpush1.msra.mxu0 0.0
  %1582 = vmatprep.subr.mxu0 0.0
  %1583 = vmatpush1.msra.mxu0 0.0
  %1584 = vmatprep.subr.mxu0 0.0
  %1585 = vmatpush1.msra.mxu0 0.0
  %1586 = vmatprep.subr.mxu0 0.0
  %1587 = vmatpush1.msra.mxu0 0.0
  %1588 = vmatprep.subr.mxu0 0.0
  %1589 = vmatpush1.msra.mxu0 0.0
  %1590 = vmatprep.subr.mxu0 0.0
  %1591 = vmatpush1.msra.mxu0 0.0
  %1592 = vmatprep.subr.mxu0 0.0
  %1593 = vmatpush1.msra.mxu0 0.0
  %1594 = vmatprep.subr.mxu0 0.0
  %1595 = vmatpush1.msra.mxu0 0.0
  %1596 = vmatprep.subr.mxu0 0.0
  %1597 = vmatpush1.msra.mxu0 0.0
  %1598 = vmatprep.subr.mxu0 0.0
  %1599 = vmatpush1.msra.mxu0 0.0
  %1600 = vmatprep.subr.mxu0 0.0
  %1601 = vmatpush1.msra.mxu0 0.0
  %1602 = vmatprep.subr.mxu0 0.0
  %1603 = vmatpush1.msra.mxu0 0.0
  %1604 = vmatprep.subr.mxu0 0.0
  %1605 = vmatpush1.msra.mxu0 0.0
  %1606 = vmatprep.subr.mxu0 0.0
  %1607 = vmatpush1.msra.mxu0 0.0
  %1608 = vmatprep.mubr.f32.mxu0 0.0
  %1609 = vmatmul.mubr.f32.gmra.mrb[0].mxu0 %v1542
  %v1610 = vpop.f32.mrb[0].mxu0
  %v1611 = vpop.f32.mrb[0].mxu0
  %v1612 = vadd.f32 0.0, %v1611
  %1613 = vdwg.mxu0
  %v1614 = vadd.f32 %v1612, %v55
  %v1615 = vadd.f32 %v1614, %v1508
  %v1616 = vxor.u32 %v1615, 2147483648
  %v1617 = vmul.f32 %v1616, 1.442695
  %v1618 = vpow.pop %v1617
  %v1619 = vadd.f32 %v1618, 1.0
  %v1620 = vrcp.pop %v1619
  %v1621 = vmul.f32 1.0, %v1620
  %1623 = vrot.lane.b32.xlu0 %v1508, 64
  %v1624 = vpop.permute.xlu0 %1623
  %v1626 = vmul.f32 %v1621, %v1624
  %1628 = vrot.lane.b32.xlu0 %v1626, 64
  %v1629 = vpop.permute.xlu0 %1628
  %v1631 = vadd.f32 %v1614, %v1629
  %v1632 = vtanh.pop %v1631
  %v1633 = vsub.f32 1.0, %v1621
  %1635 = vrot.lane.b32.xlu0 %v1632, 96
  %v1636 = vpop.permute.xlu0 %1635
  %v1638 = vmul.f32 %v1633, %v1636
  %v1639 = vmul.f32 %v1621, %v1435
  %v1640 = vadd.f32 %v1638, %v1639
  %v1641 = vld [vmem:[%s6] sm:$0xff]
  %v1642 = vld [vmem:[%s6 + $0x8] sm:$0xff]
  %v1643 = vld [vmem:[%s6 + $0x10] sm:$0xff]
  %v1644 = vld [vmem:[%s6 + $0x18] sm:$0xff]
  %v1645 = vld [vmem:[#allocation2] sm:$0x1]
  %v1647 = vlaneseq
  %v1648 = vshrl.u32 %v1647, 7
  %v1649 = vsub.s32 0, %v1648
  %v1650 = vrot.slane %v1645, %v1649
  %1653 = vrot.lane.b32.xlu0 %v1640, 96
  %v1654 = vpop.permute.xlu0 %1653
  %v1655 = vsel %vm93, %v1654, 0
  %1657 = vmatprep.subr.mxu0 0.0
  %1658 = vmatpush1.msra.mxu0 %v1641
  %1659 = vmatprep.subr.mxu0 0.0
  %1660 = vmatpush1.msra.mxu0 %v1642
  %1661 = vmatprep.subr.mxu0 0.0
  %1662 = vmatpush1.msra.mxu0 %v1643
  %1663 = vmatprep.subr.mxu0 0.0
  %1664 = vmatpush1.msra.mxu0 %v1644
  %1665 = vmatprep.subr.mxu0 0.0
  %1666 = vmatpush1.msra.mxu0 0.0
  %1667 = vmatprep.subr.mxu0 0.0
  %1668 = vmatpush1.msra.mxu0 0.0
  %1669 = vmatprep.subr.mxu0 0.0
  %1670 = vmatpush1.msra.mxu0 0.0
  %1671 = vmatprep.subr.mxu0 0.0
  %1672 = vmatpush1.msra.mxu0 0.0
  %1673 = vmatprep.subr.mxu0 0.0
  %1674 = vmatpush1.msra.mxu0 0.0
  %1675 = vmatprep.subr.mxu0 0.0
  %1676 = vmatpush1.msra.mxu0 0.0
  %1677 = vmatprep.subr.mxu0 0.0
  %1678 = vmatpush1.msra.mxu0 0.0
  %1679 = vmatprep.subr.mxu0 0.0
  %1680 = vmatpush1.msra.mxu0 0.0
  %1681 = vmatprep.subr.mxu0 0.0
  %1682 = vmatpush1.msra.mxu0 0.0
  %1683 = vmatprep.subr.mxu0 0.0
  %1684 = vmatpush1.msra.mxu0 0.0
  %1685 = vmatprep.subr.mxu0 0.0
  %1686 = vmatpush1.msra.mxu0 0.0
  %1687 = vmatprep.subr.mxu0 0.0
  %1688 = vmatpush1.msra.mxu0 0.0
  %1689 = vmatprep.subr.mxu0 0.0
  %1690 = vmatpush1.msra.mxu0 0.0
  %1691 = vmatprep.subr.mxu0 0.0
  %1692 = vmatpush1.msra.mxu0 0.0
  %1693 = vmatprep.subr.mxu0 0.0
  %1694 = vmatpush1.msra.mxu0 0.0
  %1695 = vmatprep.subr.mxu0 0.0
  %1696 = vmatpush1.msra.mxu0 0.0
  %1697 = vmatprep.subr.mxu0 0.0
  %1698 = vmatpush1.msra.mxu0 0.0
  %1699 = vmatprep.subr.mxu0 0.0
  %1700 = vmatpush1.msra.mxu0 0.0
  %1701 = vmatprep.subr.mxu0 0.0
  %1702 = vmatpush1.msra.mxu0 0.0
  %1703 = vmatprep.subr.mxu0 0.0
  %1704 = vmatpush1.msra.mxu0 0.0
  %1705 = vmatprep.subr.mxu0 0.0
  %1706 = vmatpush1.msra.mxu0 0.0
  %1707 = vmatprep.subr.mxu0 0.0
  %1708 = vmatpush1.msra.mxu0 0.0
  %1709 = vmatprep.subr.mxu0 0.0
  %1710 = vmatpush1.msra.mxu0 0.0
  %1711 = vmatprep.subr.mxu0 0.0
  %1712 = vmatpush1.msra.mxu0 0.0
  %1713 = vmatprep.subr.mxu0 0.0
  %1714 = vmatpush1.msra.mxu0 0.0
  %1715 = vmatprep.subr.mxu0 0.0
  %1716 = vmatpush1.msra.mxu0 0.0
  %1717 = vmatprep.subr.mxu0 0.0
  %1718 = vmatpush1.msra.mxu0 0.0
  %1719 = vmatprep.subr.mxu0 0.0
  %1720 = vmatpush1.msra.mxu0 0.0
  %1721 = vmatprep.mubr.f32.mxu0 0.0
  %1722 = vmatmul.mubr.f32.gmra.mrb[0].mxu0 %v1655
  %v1723 = vpop.f32.mrb[0].mxu0
  %v1724 = vadd.f32 %v1650, %v1723
  %v1725 = vpop.f32.mrb[0].mxu0
  %1726 = vdwg.mxu0
  %vm1727 = vcmask 1024
  %1728 = vst.msk [vmem:[%s8] sm:$0x3] %vm1727, %v1724
  // Predicated region
  $region34: #{gru_forward.1} parent=0 // pred_check
    _
  $region35: #{gru_forward.1} parent=0 // pred_check_branch
    %1730 = sbr.rel (0) target = $region37
  $region36: #{gru_forward.1} parent=0 // pred_region
    _
  $region37: #{gru_forward.1} parent=0 // pred_fallthru
    _
  // Predicated region
  $region38: #{gru_forward.1} parent=0 // pred_check
    _
  $region39: #{gru_forward.1} parent=0 // pred_check_branch
    %1732 = sbr.rel (0) target = $region41
  $region40: #{gru_forward.1} parent=0 // pred_region
    _
  $region41: #{gru_forward.1} parent=0 // pred_fallthru
    _

</llo_original>
